<compile_context>
chip_gen: v7x
topology: tpu7x:2x2x1
jax: 0.10.0
libtpu: 0.0.40
codegen_flags: <defaults>
</compile_context>

<pallas_src>
import jax
import jax.numpy as jnp
from jax import lax
from jax.experimental import pallas as pl
from jax.experimental.pallas import tpu as pltpu


def video_encoder_kernel(x_ref, wlin_ref, blin_ref, wih_ref, bg_ref, whh_ref,
                         hc_ref, gx_sc, h_sc, c_sc):
    """One grid step == one chunk of TC time steps.

    x_ref   : (TC*B, F)   time-major input rows for this chunk (row = t*B + b)
    wlin_ref: (F, U)      linear weight, pre-transposed
    blin_ref: (1, U)      linear bias
    wih_ref : (U, 4U)     LSTM input->gates weight, pre-transposed
    bg_ref  : (1, 4U)     fused gate bias (b_ih + b_hh)
    whh_ref : (U, 4U)     LSTM hidden->gates weight, pre-transposed
    hc_ref  : (B, 2U)     output [h_T | c_T], written on the last chunk only
    gx_sc   : (TC*B, 4U)  VMEM scratch: input contribution to the gates, per chunk
    h_sc    : (B, U)      VMEM scratch: h carry across chunks
    c_sc    : (B, U)      VMEM scratch: c carry across chunks
    """
    ci = pl.program_id(0)
    n_chunks = pl.num_programs(0)
    B, U = h_sc.shape
    TC = gx_sc.shape[0] // B

    # Zero initial state (nn.LSTM default when no (h0, c0) is supplied).
    @pl.when(ci == 0)
    def _():
        h_sc[...] = jnp.zeros_like(h_sc)
        c_sc[...] = jnp.zeros_like(c_sc)

    # ---- Batched (non-recurrent) part: whole chunk in two MXU matmuls. ----
    x_lin = jnp.maximum(
        jnp.dot(x_ref[...], wlin_ref[...], preferred_element_type=jnp.float32)
        + blin_ref[...],
        0.0,
    )                                                          # (TC*B, U)
    gx_sc[...] = (
        jnp.dot(x_lin, wih_ref[...], preferred_element_type=jnp.float32)
        + bg_ref[...]
    )                                                          # (TC*B, 4U)

    whh = whh_ref[...]                                         # keep resident in vregs

    # ---- Sequential (recurrent) part: minimal per-step work. ----
    def step(t, carry):
        h, c = carry
        r0 = pl.multiple_of(t * B, B)
        gates = gx_sc[pl.ds(r0, B), :] + jnp.dot(
            h, whh, preferred_element_type=jnp.float32)        # (B, 4U)
        i_g = jax.nn.sigmoid(gates[:, 0 * U:1 * U])
        f_g = jax.nn.sigmoid(gates[:, 1 * U:2 * U])
        g_g = jnp.tanh(gates[:, 2 * U:3 * U])
        o_g = jax.nn.sigmoid(gates[:, 3 * U:4 * U])
        c_new = f_g * c + i_g * g_g
        h_new = o_g * jnp.tanh(c_new)
        return h_new, c_new

    h, c = lax.fori_loop(0, TC, step, (h_sc[...], c_sc[...]), unroll=True)

    h_sc[...] = h
    c_sc[...] = c

    # Only the final state ever leaves the chip (one lane-dense (8,128) store).
    @pl.when(ci == n_chunks - 1)
    def _():
        hc_ref[:, :U] = h
        hc_ref[:, U:] = c


def video_encoder_forward(xv, params, chunk=8):
    """xv: (B, T, F) float32. Returns (Xv[:, -1, :], (h, c)) like the PyTorch module."""
    B, T, F_ = xv.shape
    U = params["w_lin_t"].shape[1]

    chunk = min(chunk, T)
    while T % chunk:
        chunk -= 1
    n_chunks = T // chunk

    # Time-major, flattened to rows (row index = t*B + b) so each chunk is one
    # contiguous, sublane/lane-friendly (chunk*B, F) slab — no in-kernel reshape.
    x_flat = jnp.transpose(xv, (1, 0, 2)).reshape(T * B, F_)

    hc = pl.pallas_call(
        video_encoder_kernel,
        out_shape=jax.ShapeDtypeStruct((B, 2 * U), jnp.float32),
        grid_spec=pltpu.PrefetchScalarGridSpec(
            num_scalar_prefetch=0,
            grid=(n_chunks,),
            in_specs=[
                pl.BlockSpec((chunk * B, F_), lambda i: (i, 0)),   # streamed input
                pl.BlockSpec((F_, U), lambda i: (0, 0)),           # resident weights
                pl.BlockSpec((1, U), lambda i: (0, 0)),
                pl.BlockSpec((U, 4 * U), lambda i: (0, 0)),
                pl.BlockSpec((1, 4 * U), lambda i: (0, 0)),
                pl.BlockSpec((U, 4 * U), lambda i: (0, 0)),
            ],
            out_specs=pl.BlockSpec((B, 2 * U), lambda i: (0, 0)),
            scratch_shapes=[
                pltpu.VMEM((chunk * B, 4 * U), jnp.float32),   # gates_x for a chunk
                pltpu.VMEM((B, U), jnp.float32),               # h carry
                pltpu.VMEM((B, U), jnp.float32),               # c carry
            ],
        ),
        compiler_params=pltpu.CompilerParams(
            dimension_semantics=("arbitrary",)),               # sequential recurrence
    )(x_flat, params["w_lin_t"], params["b_lin"],
      params["w_ih_t"], params["b_gates"], params["w_hh_t"])

    h = hc[:, :U]
    c = hc[:, U:]
    return h, (h, c)   # Xv[:, -1, :] == h_T for a 1-layer unidirectional LSTM


def video_encoder_reference(xv, params):
    """Pure-JAX reference with identical math (for correctness checking)."""
    w_lin_t, b_lin = params["w_lin_t"], params["b_lin"]
    w_ih_t, w_hh_t, b_g = params["w_ih_t"], params["w_hh_t"], params["b_gates"]
    B, T, _ = xv.shape
    U = w_lin_t.shape[1]

    x_lin = jax.nn.relu(jnp.einsum("btf,fu->btu", xv, w_lin_t) + b_lin[0])

    def step(carry, x_t):
        h, c = carry
        gates = x_t @ w_ih_t + h @ w_hh_t + b_g[0]
        i_g = jax.nn.sigmoid(gates[:, 0 * U:1 * U])
        f_g = jax.nn.sigmoid(gates[:, 1 * U:2 * U])
        g_g = jnp.tanh(gates[:, 2 * U:3 * U])
        o_g = jax.nn.sigmoid(gates[:, 3 * U:4 * U])
        c = f_g * c + i_g * g_g
        h = o_g * jnp.tanh(c)
        return (h, c), None

    init = (jnp.zeros((B, U), jnp.float32), jnp.zeros((B, U), jnp.float32))
    (h, c), _ = lax.scan(step, init, jnp.transpose(x_lin, (1, 0, 2)))
    return h, (h, c)


def init_params(key, in_size, units):
    """Synthetic init mirroring VideoEncoder.reset_parameters:
       xavier-uniform for linear/ih weights, orthogonal for hh, zero biases."""
    k_lin, k_ih, k_hh = jax.random.split(key, 3)

    lim_lin = (6.0 / (in_size + units)) ** 0.5
    w_lin = jax.random.uniform(k_lin, (units, in_size),
                               minval=-lim_lin, maxval=lim_lin, dtype=jnp.float32)

    lim_ih = (6.0 / (4 * units + units)) ** 0.5
    w_ih = jax.random.uniform(k_ih, (4 * units, units),
                              minval=-lim_ih, maxval=lim_ih, dtype=jnp.float32)

    a = jax.random.normal(k_hh, (4 * units, units), dtype=jnp.float32)
    q, _ = jnp.linalg.qr(a)                        # orthonormal columns
    w_hh = q.astype(jnp.float32)

    # TODO(synk): optional bf16 weights (halved weight footprint / native MXU path
    # on v6e/v7x) kept f32 here for exact-f32 math and v5e portability.
    return {
        "w_lin_t": w_lin.T,                                   # (F, U)
        "b_lin": jnp.zeros((1, units), jnp.float32),          # (1, U)
        "w_ih_t": w_ih.T,                                     # (U, 4U)
        "w_hh_t": w_hh.T,                                     # (U, 4U)
        "b_gates": jnp.zeros((1, 4 * units), jnp.float32),    # (1, 4U)  b_ih + b_hh
    }


if __name__ == "__main__":
    in_size = 96
    units = 64      # 2*units == 128 -> lane-dense packed (h|c) output
    batch = 8
    seq = 16

    key = jax.random.PRNGKey(0)
    k_params, k_x = jax.random.split(key)

    params = init_params(k_params, in_size, units)
    xv = jax.random.normal(k_x, (batch, seq, in_size), dtype=jnp.float32)

    xv_last, (h, c) = video_encoder_forward(xv, params, chunk=8)
    jax.block_until_ready((xv_last, h, c))

    assert xv_last.shape == (batch, units)
    assert h.shape == (batch, units) and c.shape == (batch, units)
    assert bool(jnp.all(jnp.isfinite(xv_last)))
    assert bool(jnp.all(jnp.isfinite(h))) and bool(jnp.all(jnp.isfinite(c)))

    # Correctness vs a pure-JAX reference of the same recurrence.
    ref_last, (ref_h, ref_c) = video_encoder_reference(xv, params)
    err = max(
        float(jnp.max(jnp.abs(xv_last - ref_last))),
        float(jnp.max(jnp.abs(h - ref_h))),
        float(jnp.max(jnp.abs(c - ref_c))),
    )
    assert err < 2e-3, f"max abs error vs reference: {err}"

    print("KERNEL_OK")
</pallas_src>

<mosaic_0001>
module attributes {stable_mosaic.version = 11 : i64} {
  func.func @video_encoder_kernel(%arg0: i32, %arg1: memref<64x96xf32, #tpu.memory_space<vmem>>, %arg2: memref<96x64xf32, #tpu.memory_space<vmem>>, %arg3: memref<1x64xf32, #tpu.memory_space<vmem>>, %arg4: memref<64x256xf32, #tpu.memory_space<vmem>>, %arg5: memref<1x256xf32, #tpu.memory_space<vmem>>, %arg6: memref<64x256xf32, #tpu.memory_space<vmem>>, %arg7: memref<8x128xf32, #tpu.memory_space<vmem>>, %arg8: memref<64x256xf32, #tpu.memory_space<vmem>>, %arg9: memref<8x64xf32, #tpu.memory_space<vmem>>, %arg10: memref<8x64xf32, #tpu.memory_space<vmem>>) attributes {dimension_semantics = [#tpu.dimension_semantics<arbitrary>], iteration_bounds = array<i64: 2>, scalar_prefetch = 0 : i64, scratch_operands = 3 : i64, tpu.core_type = #tpu.core_type<tc>, window_params = [{transform_indices = @transform_0, window_bounds = array<i64: 64, 96>}, {pipeline_mode = #tpu.pipeline_mode<synchronous>, transform_indices = @transform_1, window_bounds = array<i64: 96, 64>}, {pipeline_mode = #tpu.pipeline_mode<synchronous>, transform_indices = @transform_2, window_bounds = array<i64: 1, 64>}, {pipeline_mode = #tpu.pipeline_mode<synchronous>, transform_indices = @transform_3, window_bounds = array<i64: 64, 256>}, {pipeline_mode = #tpu.pipeline_mode<synchronous>, transform_indices = @transform_4, window_bounds = array<i64: 1, 256>}, {pipeline_mode = #tpu.pipeline_mode<synchronous>, transform_indices = @transform_5, window_bounds = array<i64: 64, 256>}, {pipeline_mode = #tpu.pipeline_mode<synchronous>, transform_indices = @transform_6, window_bounds = array<i64: 8, 128>}]} {
    %c0_i32 = arith.constant 0 : i32
    %0 = arith.cmpi eq, %arg0, %c0_i32 : i32
    %1 = arith.extui %0 : i1 to i32
    %c0_i32_0 = arith.constant 0 : i32
    %2 = arith.cmpi ne, %1, %c0_i32_0 : i32
    scf.if %2 {
      %cst_75 = arith.constant 0.000000e+00 : f32
      %273 = vector.broadcast %cst_75 : f32 to vector<8x64xf32>
      %c0_76 = arith.constant 0 : index
      %c0_77 = arith.constant 0 : index
      %274 = vector.load %arg9[%c0_76, %c0_77] : memref<8x64xf32, #tpu.memory_space<vmem>>, vector<8x64xf32>
      tpu.vector_store %arg9[%c0_76, %c0_77], %273 {strides = array<i32>} : memref<8x64xf32, #tpu.memory_space<vmem>>, vector<8x64xf32>,
      %cst_78 = arith.constant 0.000000e+00 : f32
      %275 = vector.broadcast %cst_78 : f32 to vector<8x64xf32>
      %c0_79 = arith.constant 0 : index
      %c0_80 = arith.constant 0 : index
      %276 = vector.load %arg10[%c0_79, %c0_80] : memref<8x64xf32, #tpu.memory_space<vmem>>, vector<8x64xf32>
      tpu.vector_store %arg10[%c0_79, %c0_80], %275 {strides = array<i32>} : memref<8x64xf32, #tpu.memory_space<vmem>>, vector<8x64xf32>,
    } else {
    }
    %c0 = arith.constant 0 : index
    %c0_1 = arith.constant 0 : index
    %3 = vector.load %arg1[%c0, %c0_1] : memref<64x96xf32, #tpu.memory_space<vmem>>, vector<64x96xf32>
    %c0_2 = arith.constant 0 : index
    %c0_3 = arith.constant 0 : index
    %4 = vector.load %arg2[%c0_2, %c0_3] : memref<96x64xf32, #tpu.memory_space<vmem>>, vector<96x64xf32>
    %cst = arith.constant dense<0.000000e+00> : vector<64x64xf32>
    %5 = tpu.matmul %3, %4, %cst {dimension_numbers = #tpu.dot_dimension_numbers<[1], [0], [0], [1], [0, 0, 1, 1], [], []>} : vector<64x96xf32>, vector<96x64xf32>, vector<64x64xf32> -> vector<64x64xf32>
    %c0_4 = arith.constant 0 : index
    %c0_5 = arith.constant 0 : index
    %6 = vector.load %arg3[%c0_4, %c0_5] : memref<1x64xf32, #tpu.memory_space<vmem>>, vector<1x64xf32>
    %7 = vector.broadcast %6 : vector<1x64xf32> to vector<64x64xf32>
    %8 = arith.addf %5, %7 : vector<64x64xf32>
    %cst_6 = arith.constant 0.000000e+00 : f32
    %9 = vector.broadcast %cst_6 : f32 to vector<64x64xf32>
    %10 = arith.maximumf %8, %9 : vector<64x64xf32>
    %c0_7 = arith.constant 0 : index
    %c0_8 = arith.constant 0 : index
    %11 = vector.load %arg4[%c0_7, %c0_8] : memref<64x256xf32, #tpu.memory_space<vmem>>, vector<64x256xf32>
    %cst_9 = arith.constant dense<0.000000e+00> : vector<64x256xf32>
    %12 = tpu.matmul %10, %11, %cst_9 {dimension_numbers = #tpu.dot_dimension_numbers<[1], [0], [0], [1], [0, 0, 1, 1], [], []>} : vector<64x64xf32>, vector<64x256xf32>, vector<64x256xf32> -> vector<64x256xf32>
    %c0_10 = arith.constant 0 : index
    %c0_11 = arith.constant 0 : index
    %13 = vector.load %arg5[%c0_10, %c0_11] : memref<1x256xf32, #tpu.memory_space<vmem>>, vector<1x256xf32>
    %14 = vector.broadcast %13 : vector<1x256xf32> to vector<64x256xf32>
    %15 = arith.addf %12, %14 : vector<64x256xf32>
    %c0_12 = arith.constant 0 : index
    %c0_13 = arith.constant 0 : index
    %16 = vector.load %arg8[%c0_12, %c0_13] : memref<64x256xf32, #tpu.memory_space<vmem>>, vector<64x256xf32>
    tpu.vector_store %arg8[%c0_12, %c0_13], %15 {strides = array<i32>} : memref<64x256xf32, #tpu.memory_space<vmem>>, vector<64x256xf32>,
    %c0_14 = arith.constant 0 : index
    %c0_15 = arith.constant 0 : index
    %17 = vector.load %arg6[%c0_14, %c0_15] : memref<64x256xf32, #tpu.memory_space<vmem>>, vector<64x256xf32>
    %c0_16 = arith.constant 0 : index
    %c0_17 = arith.constant 0 : index
    %18 = vector.load %arg9[%c0_16, %c0_17] : memref<8x64xf32, #tpu.memory_space<vmem>>, vector<8x64xf32>
    %c0_18 = arith.constant 0 : index
    %c0_19 = arith.constant 0 : index
    %19 = vector.load %arg10[%c0_18, %c0_19] : memref<8x64xf32, #tpu.memory_space<vmem>>, vector<8x64xf32>
    %c0_i32_20 = arith.constant 0 : i32
    %c8_i32 = arith.constant 8 : i32
    %20 = arith.muli %c0_i32_20, %c8_i32 : i32
    %21 = tpu.assume_multiple %20, 8 : i32
    %22 = arith.index_cast %21 : i32 to index
    %c0_21 = arith.constant 0 : index
    %23 = vector.load %arg8[%22, %c0_21] : memref<64x256xf32, #tpu.memory_space<vmem>>, vector<8x256xf32>
    %cst_22 = arith.constant dense<0.000000e+00> : vector<8x256xf32>
    %24 = tpu.matmul %18, %17, %cst_22 {dimension_numbers = #tpu.dot_dimension_numbers<[1], [0], [0], [1], [0, 0, 1, 1], [], []>} : vector<8x64xf32>, vector<64x256xf32>, vector<8x256xf32> -> vector<8x256xf32>
    %25 = arith.addf %23, %24 : vector<8x256xf32>
    %26 = vector.extract_strided_slice %25 {offsets = [0, 0], sizes = [8, 64], strides = [1, 1]} : vector<8x256xf32> to vector<8x64xf32>
    %27 = arith.negf %26 : vector<8x64xf32>
    %28 = math.exp %27 : vector<8x64xf32>
    %cst_23 = arith.constant 1.000000e+00 : f32
    %29 = vector.broadcast %cst_23 : f32 to vector<8x64xf32>
    %30 = arith.addf %29, %28 : vector<8x64xf32>
    %31 = arith.divf %29, %30 : vector<8x64xf32>
    %32 = vector.extract_strided_slice %25 {offsets = [0, 64], sizes = [8, 64], strides = [1, 1]} : vector<8x256xf32> to vector<8x64xf32>
    %33 = arith.negf %32 : vector<8x64xf32>
    %34 = math.exp %33 : vector<8x64xf32>
    %cst_24 = arith.constant 1.000000e+00 : f32
    %35 = vector.broadcast %cst_24 : f32 to vector<8x64xf32>
    %36 = arith.addf %35, %34 : vector<8x64xf32>
    %37 = arith.divf %35, %36 : vector<8x64xf32>
    %38 = vector.extract_strided_slice %25 {offsets = [0, 128], sizes = [8, 64], strides = [1, 1]} : vector<8x256xf32> to vector<8x64xf32>
    %39 = math.tanh %38 : vector<8x64xf32>
    %40 = vector.extract_strided_slice %25 {offsets = [0, 192], sizes = [8, 64], strides = [1, 1]} : vector<8x256xf32> to vector<8x64xf32>
    %41 = arith.negf %40 : vector<8x64xf32>
    %42 = math.exp %41 : vector<8x64xf32>
    %cst_25 = arith.constant 1.000000e+00 : f32
    %43 = vector.broadcast %cst_25 : f32 to vector<8x64xf32>
    %44 = arith.addf %43, %42 : vector<8x64xf32>
    %45 = arith.divf %43, %44 : vector<8x64xf32>
    %46 = arith.mulf %37, %19 : vector<8x64xf32>
    %47 = arith.mulf %31, %39 : vector<8x64xf32>
    %48 = arith.addf %46, %47 : vector<8x64xf32>
    %49 = math.tanh %48 : vector<8x64xf32>
    %50 = arith.mulf %45, %49 : vector<8x64xf32>
    %c1_i32 = arith.constant 1 : i32
    %c8_i32_26 = arith.constant 8 : i32
    %51 = arith.muli %c1_i32, %c8_i32_26 : i32
    %52 = tpu.assume_multiple %51, 8 : i32
    %53 = arith.index_cast %52 : i32 to index
    %c0_27 = arith.constant 0 : index
    %54 = vector.load %arg8[%53, %c0_27] : memref<64x256xf32, #tpu.memory_space<vmem>>, vector<8x256xf32>
    %cst_28 = arith.constant dense<0.000000e+00> : vector<8x256xf32>
    %55 = tpu.matmul %50, %17, %cst_28 {dimension_numbers = #tpu.dot_dimension_numbers<[1], [0], [0], [1], [0, 0, 1, 1], [], []>} : vector<8x64xf32>, vector<64x256xf32>, vector<8x256xf32> -> vector<8x256xf32>
    %56 = arith.addf %54, %55 : vector<8x256xf32>
    %57 = vector.extract_strided_slice %56 {offsets = [0, 0], sizes = [8, 64], strides = [1, 1]} : vector<8x256xf32> to vector<8x64xf32>
    %58 = arith.negf %57 : vector<8x64xf32>
    %59 = math.exp %58 : vector<8x64xf32>
    %cst_29 = arith.constant 1.000000e+00 : f32
    %60 = vector.broadcast %cst_29 : f32 to vector<8x64xf32>
    %61 = arith.addf %60, %59 : vector<8x64xf32>
    %62 = arith.divf %60, %61 : vector<8x64xf32>
    %63 = vector.extract_strided_slice %56 {offsets = [0, 64], sizes = [8, 64], strides = [1, 1]} : vector<8x256xf32> to vector<8x64xf32>
    %64 = arith.negf %63 : vector<8x64xf32>
    %65 = math.exp %64 : vector<8x64xf32>
    %cst_30 = arith.constant 1.000000e+00 : f32
    %66 = vector.broadcast %cst_30 : f32 to vector<8x64xf32>
    %67 = arith.addf %66, %65 : vector<8x64xf32>
    %68 = arith.divf %66, %67 : vector<8x64xf32>
    %69 = vector.extract_strided_slice %56 {offsets = [0, 128], sizes = [8, 64], strides = [1, 1]} : vector<8x256xf32> to vector<8x64xf32>
    %70 = math.tanh %69 : vector<8x64xf32>
    %71 = vector.extract_strided_slice %56 {offsets = [0, 192], sizes = [8, 64], strides = [1, 1]} : vector<8x256xf32> to vector<8x64xf32>
    %72 = arith.negf %71 : vector<8x64xf32>
    %73 = math.exp %72 : vector<8x64xf32>
    %cst_31 = arith.constant 1.000000e+00 : f32
    %74 = vector.broadcast %cst_31 : f32 to vector<8x64xf32>
    %75 = arith.addf %74, %73 : vector<8x64xf32>
    %76 = arith.divf %74, %75 : vector<8x64xf32>
    %77 = arith.mulf %68, %48 : vector<8x64xf32>
    %78 = arith.mulf %62, %70 : vector<8x64xf32>
    %79 = arith.addf %77, %78 : vector<8x64xf32>
    %80 = math.tanh %79 : vector<8x64xf32>
    %81 = arith.mulf %76, %80 : vector<8x64xf32>
    %c2_i32 = arith.constant 2 : i32
    %c8_i32_32 = arith.constant 8 : i32
    %82 = arith.muli %c2_i32, %c8_i32_32 : i32
    %83 = tpu.assume_multiple %82, 8 : i32
    %84 = arith.index_cast %83 : i32 to index
    %c0_33 = arith.constant 0 : index
    %85 = vector.load %arg8[%84, %c0_33] : memref<64x256xf32, #tpu.memory_space<vmem>>, vector<8x256xf32>
    %cst_34 = arith.constant dense<0.000000e+00> : vector<8x256xf32>
    %86 = tpu.matmul %81, %17, %cst_34 {dimension_numbers = #tpu.dot_dimension_numbers<[1], [0], [0], [1], [0, 0, 1, 1], [], []>} : vector<8x64xf32>, vector<64x256xf32>, vector<8x256xf32> -> vector<8x256xf32>
    %87 = arith.addf %85, %86 : vector<8x256xf32>
    %88 = vector.extract_strided_slice %87 {offsets = [0, 0], sizes = [8, 64], strides = [1, 1]} : vector<8x256xf32> to vector<8x64xf32>
    %89 = arith.negf %88 : vector<8x64xf32>
    %90 = math.exp %89 : vector<8x64xf32>
    %cst_35 = arith.constant 1.000000e+00 : f32
    %91 = vector.broadcast %cst_35 : f32 to vector<8x64xf32>
    %92 = arith.addf %91, %90 : vector<8x64xf32>
    %93 = arith.divf %91, %92 : vector<8x64xf32>
    %94 = vector.extract_strided_slice %87 {offsets = [0, 64], sizes = [8, 64], strides = [1, 1]} : vector<8x256xf32> to vector<8x64xf32>
    %95 = arith.negf %94 : vector<8x64xf32>
    %96 = math.exp %95 : vector<8x64xf32>
    %cst_36 = arith.constant 1.000000e+00 : f32
    %97 = vector.broadcast %cst_36 : f32 to vector<8x64xf32>
    %98 = arith.addf %97, %96 : vector<8x64xf32>
    %99 = arith.divf %97, %98 : vector<8x64xf32>
    %100 = vector.extract_strided_slice %87 {offsets = [0, 128], sizes = [8, 64], strides = [1, 1]} : vector<8x256xf32> to vector<8x64xf32>
    %101 = math.tanh %100 : vector<8x64xf32>
    %102 = vector.extract_strided_slice %87 {offsets = [0, 192], sizes = [8, 64], strides = [1, 1]} : vector<8x256xf32> to vector<8x64xf32>
    %103 = arith.negf %102 : vector<8x64xf32>
    %104 = math.exp %103 : vector<8x64xf32>
    %cst_37 = arith.constant 1.000000e+00 : f32
    %105 = vector.broadcast %cst_37 : f32 to vector<8x64xf32>
    %106 = arith.addf %105, %104 : vector<8x64xf32>
    %107 = arith.divf %105, %106 : vector<8x64xf32>
    %108 = arith.mulf %99, %79 : vector<8x64xf32>
    %109 = arith.mulf %93, %101 : vector<8x64xf32>
    %110 = arith.addf %108, %109 : vector<8x64xf32>
    %111 = math.tanh %110 : vector<8x64xf32>
    %112 = arith.mulf %107, %111 : vector<8x64xf32>
    %c3_i32 = arith.constant 3 : i32
    %c8_i32_38 = arith.constant 8 : i32
    %113 = arith.muli %c3_i32, %c8_i32_38 : i32
    %114 = tpu.assume_multiple %113, 8 : i32
    %115 = arith.index_cast %114 : i32 to index
    %c0_39 = arith.constant 0 : index
    %116 = vector.load %arg8[%115, %c0_39] : memref<64x256xf32, #tpu.memory_space<vmem>>, vector<8x256xf32>
    %cst_40 = arith.constant dense<0.000000e+00> : vector<8x256xf32>
    %117 = tpu.matmul %112, %17, %cst_40 {dimension_numbers = #tpu.dot_dimension_numbers<[1], [0], [0], [1], [0, 0, 1, 1], [], []>} : vector<8x64xf32>, vector<64x256xf32>, vector<8x256xf32> -> vector<8x256xf32>
    %118 = arith.addf %116, %117 : vector<8x256xf32>
    %119 = vector.extract_strided_slice %118 {offsets = [0, 0], sizes = [8, 64], strides = [1, 1]} : vector<8x256xf32> to vector<8x64xf32>
    %120 = arith.negf %119 : vector<8x64xf32>
    %121 = math.exp %120 : vector<8x64xf32>
    %cst_41 = arith.constant 1.000000e+00 : f32
    %122 = vector.broadcast %cst_41 : f32 to vector<8x64xf32>
    %123 = arith.addf %122, %121 : vector<8x64xf32>
    %124 = arith.divf %122, %123 : vector<8x64xf32>
    %125 = vector.extract_strided_slice %118 {offsets = [0, 64], sizes = [8, 64], strides = [1, 1]} : vector<8x256xf32> to vector<8x64xf32>
    %126 = arith.negf %125 : vector<8x64xf32>
    %127 = math.exp %126 : vector<8x64xf32>
    %cst_42 = arith.constant 1.000000e+00 : f32
    %128 = vector.broadcast %cst_42 : f32 to vector<8x64xf32>
    %129 = arith.addf %128, %127 : vector<8x64xf32>
    %130 = arith.divf %128, %129 : vector<8x64xf32>
    %131 = vector.extract_strided_slice %118 {offsets = [0, 128], sizes = [8, 64], strides = [1, 1]} : vector<8x256xf32> to vector<8x64xf32>
    %132 = math.tanh %131 : vector<8x64xf32>
    %133 = vector.extract_strided_slice %118 {offsets = [0, 192], sizes = [8, 64], strides = [1, 1]} : vector<8x256xf32> to vector<8x64xf32>
    %134 = arith.negf %133 : vector<8x64xf32>
    %135 = math.exp %134 : vector<8x64xf32>
    %cst_43 = arith.constant 1.000000e+00 : f32
    %136 = vector.broadcast %cst_43 : f32 to vector<8x64xf32>
    %137 = arith.addf %136, %135 : vector<8x64xf32>
    %138 = arith.divf %136, %137 : vector<8x64xf32>
    %139 = arith.mulf %130, %110 : vector<8x64xf32>
    %140 = arith.mulf %124, %132 : vector<8x64xf32>
    %141 = arith.addf %139, %140 : vector<8x64xf32>
    %142 = math.tanh %141 : vector<8x64xf32>
    %143 = arith.mulf %138, %142 : vector<8x64xf32>
    %c4_i32 = arith.constant 4 : i32
    %c8_i32_44 = arith.constant 8 : i32
    %144 = arith.muli %c4_i32, %c8_i32_44 : i32
    %145 = tpu.assume_multiple %144, 8 : i32
    %146 = arith.index_cast %145 : i32 to index
    %c0_45 = arith.constant 0 : index
    %147 = vector.load %arg8[%146, %c0_45] : memref<64x256xf32, #tpu.memory_space<vmem>>, vector<8x256xf32>
    %cst_46 = arith.constant dense<0.000000e+00> : vector<8x256xf32>
    %148 = tpu.matmul %143, %17, %cst_46 {dimension_numbers = #tpu.dot_dimension_numbers<[1], [0], [0], [1], [0, 0, 1, 1], [], []>} : vector<8x64xf32>, vector<64x256xf32>, vector<8x256xf32> -> vector<8x256xf32>
    %149 = arith.addf %147, %148 : vector<8x256xf32>
    %150 = vector.extract_strided_slice %149 {offsets = [0, 0], sizes = [8, 64], strides = [1, 1]} : vector<8x256xf32> to vector<8x64xf32>
    %151 = arith.negf %150 : vector<8x64xf32>
    %152 = math.exp %151 : vector<8x64xf32>
    %cst_47 = arith.constant 1.000000e+00 : f32
    %153 = vector.broadcast %cst_47 : f32 to vector<8x64xf32>
    %154 = arith.addf %153, %152 : vector<8x64xf32>
    %155 = arith.divf %153, %154 : vector<8x64xf32>
    %156 = vector.extract_strided_slice %149 {offsets = [0, 64], sizes = [8, 64], strides = [1, 1]} : vector<8x256xf32> to vector<8x64xf32>
    %157 = arith.negf %156 : vector<8x64xf32>
    %158 = math.exp %157 : vector<8x64xf32>
    %cst_48 = arith.constant 1.000000e+00 : f32
    %159 = vector.broadcast %cst_48 : f32 to vector<8x64xf32>
    %160 = arith.addf %159, %158 : vector<8x64xf32>
    %161 = arith.divf %159, %160 : vector<8x64xf32>
    %162 = vector.extract_strided_slice %149 {offsets = [0, 128], sizes = [8, 64], strides = [1, 1]} : vector<8x256xf32> to vector<8x64xf32>
    %163 = math.tanh %162 : vector<8x64xf32>
    %164 = vector.extract_strided_slice %149 {offsets = [0, 192], sizes = [8, 64], strides = [1, 1]} : vector<8x256xf32> to vector<8x64xf32>
    %165 = arith.negf %164 : vector<8x64xf32>
    %166 = math.exp %165 : vector<8x64xf32>
    %cst_49 = arith.constant 1.000000e+00 : f32
    %167 = vector.broadcast %cst_49 : f32 to vector<8x64xf32>
    %168 = arith.addf %167, %166 : vector<8x64xf32>
    %169 = arith.divf %167, %168 : vector<8x64xf32>
    %170 = arith.mulf %161, %141 : vector<8x64xf32>
    %171 = arith.mulf %155, %163 : vector<8x64xf32>
    %172 = arith.addf %170, %171 : vector<8x64xf32>
    %173 = math.tanh %172 : vector<8x64xf32>
    %174 = arith.mulf %169, %173 : vector<8x64xf32>
    %c5_i32 = arith.constant 5 : i32
    %c8_i32_50 = arith.constant 8 : i32
    %175 = arith.muli %c5_i32, %c8_i32_50 : i32
    %176 = tpu.assume_multiple %175, 8 : i32
    %177 = arith.index_cast %176 : i32 to index
    %c0_51 = arith.constant 0 : index
    %178 = vector.load %arg8[%177, %c0_51] : memref<64x256xf32, #tpu.memory_space<vmem>>, vector<8x256xf32>
    %cst_52 = arith.constant dense<0.000000e+00> : vector<8x256xf32>
    %179 = tpu.matmul %174, %17, %cst_52 {dimension_numbers = #tpu.dot_dimension_numbers<[1], [0], [0], [1], [0, 0, 1, 1], [], []>} : vector<8x64xf32>, vector<64x256xf32>, vector<8x256xf32> -> vector<8x256xf32>
    %180 = arith.addf %178, %179 : vector<8x256xf32>
    %181 = vector.extract_strided_slice %180 {offsets = [0, 0], sizes = [8, 64], strides = [1, 1]} : vector<8x256xf32> to vector<8x64xf32>
    %182 = arith.negf %181 : vector<8x64xf32>
    %183 = math.exp %182 : vector<8x64xf32>
    %cst_53 = arith.constant 1.000000e+00 : f32
    %184 = vector.broadcast %cst_53 : f32 to vector<8x64xf32>
    %185 = arith.addf %184, %183 : vector<8x64xf32>
    %186 = arith.divf %184, %185 : vector<8x64xf32>
    %187 = vector.extract_strided_slice %180 {offsets = [0, 64], sizes = [8, 64], strides = [1, 1]} : vector<8x256xf32> to vector<8x64xf32>
    %188 = arith.negf %187 : vector<8x64xf32>
    %189 = math.exp %188 : vector<8x64xf32>
    %cst_54 = arith.constant 1.000000e+00 : f32
    %190 = vector.broadcast %cst_54 : f32 to vector<8x64xf32>
    %191 = arith.addf %190, %189 : vector<8x64xf32>
    %192 = arith.divf %190, %191 : vector<8x64xf32>
    %193 = vector.extract_strided_slice %180 {offsets = [0, 128], sizes = [8, 64], strides = [1, 1]} : vector<8x256xf32> to vector<8x64xf32>
    %194 = math.tanh %193 : vector<8x64xf32>
    %195 = vector.extract_strided_slice %180 {offsets = [0, 192], sizes = [8, 64], strides = [1, 1]} : vector<8x256xf32> to vector<8x64xf32>
    %196 = arith.negf %195 : vector<8x64xf32>
    %197 = math.exp %196 : vector<8x64xf32>
    %cst_55 = arith.constant 1.000000e+00 : f32
    %198 = vector.broadcast %cst_55 : f32 to vector<8x64xf32>
    %199 = arith.addf %198, %197 : vector<8x64xf32>
    %200 = arith.divf %198, %199 : vector<8x64xf32>
    %201 = arith.mulf %192, %172 : vector<8x64xf32>
    %202 = arith.mulf %186, %194 : vector<8x64xf32>
    %203 = arith.addf %201, %202 : vector<8x64xf32>
    %204 = math.tanh %203 : vector<8x64xf32>
    %205 = arith.mulf %200, %204 : vector<8x64xf32>
    %c6_i32 = arith.constant 6 : i32
    %c8_i32_56 = arith.constant 8 : i32
    %206 = arith.muli %c6_i32, %c8_i32_56 : i32
    %207 = tpu.assume_multiple %206, 8 : i32
    %208 = arith.index_cast %207 : i32 to index
    %c0_57 = arith.constant 0 : index
    %209 = vector.load %arg8[%208, %c0_57] : memref<64x256xf32, #tpu.memory_space<vmem>>, vector<8x256xf32>
    %cst_58 = arith.constant dense<0.000000e+00> : vector<8x256xf32>
    %210 = tpu.matmul %205, %17, %cst_58 {dimension_numbers = #tpu.dot_dimension_numbers<[1], [0], [0], [1], [0, 0, 1, 1], [], []>} : vector<8x64xf32>, vector<64x256xf32>, vector<8x256xf32> -> vector<8x256xf32>
    %211 = arith.addf %209, %210 : vector<8x256xf32>
    %212 = vector.extract_strided_slice %211 {offsets = [0, 0], sizes = [8, 64], strides = [1, 1]} : vector<8x256xf32> to vector<8x64xf32>
    %213 = arith.negf %212 : vector<8x64xf32>
    %214 = math.exp %213 : vector<8x64xf32>
    %cst_59 = arith.constant 1.000000e+00 : f32
    %215 = vector.broadcast %cst_59 : f32 to vector<8x64xf32>
    %216 = arith.addf %215, %214 : vector<8x64xf32>
    %217 = arith.divf %215, %216 : vector<8x64xf32>
    %218 = vector.extract_strided_slice %211 {offsets = [0, 64], sizes = [8, 64], strides = [1, 1]} : vector<8x256xf32> to vector<8x64xf32>
    %219 = arith.negf %218 : vector<8x64xf32>
    %220 = math.exp %219 : vector<8x64xf32>
    %cst_60 = arith.constant 1.000000e+00 : f32
    %221 = vector.broadcast %cst_60 : f32 to vector<8x64xf32>
    %222 = arith.addf %221, %220 : vector<8x64xf32>
    %223 = arith.divf %221, %222 : vector<8x64xf32>
    %224 = vector.extract_strided_slice %211 {offsets = [0, 128], sizes = [8, 64], strides = [1, 1]} : vector<8x256xf32> to vector<8x64xf32>
    %225 = math.tanh %224 : vector<8x64xf32>
    %226 = vector.extract_strided_slice %211 {offsets = [0, 192], sizes = [8, 64], strides = [1, 1]} : vector<8x256xf32> to vector<8x64xf32>
    %227 = arith.negf %226 : vector<8x64xf32>
    %228 = math.exp %227 : vector<8x64xf32>
    %cst_61 = arith.constant 1.000000e+00 : f32
    %229 = vector.broadcast %cst_61 : f32 to vector<8x64xf32>
    %230 = arith.addf %229, %228 : vector<8x64xf32>
    %231 = arith.divf %229, %230 : vector<8x64xf32>
    %232 = arith.mulf %223, %203 : vector<8x64xf32>
    %233 = arith.mulf %217, %225 : vector<8x64xf32>
    %234 = arith.addf %232, %233 : vector<8x64xf32>
    %235 = math.tanh %234 : vector<8x64xf32>
    %236 = arith.mulf %231, %235 : vector<8x64xf32>
    %c7_i32 = arith.constant 7 : i32
    %c8_i32_62 = arith.constant 8 : i32
    %237 = arith.muli %c7_i32, %c8_i32_62 : i32
    %238 = tpu.assume_multiple %237, 8 : i32
    %239 = arith.index_cast %238 : i32 to index
    %c0_63 = arith.constant 0 : index
    %240 = vector.load %arg8[%239, %c0_63] : memref<64x256xf32, #tpu.memory_space<vmem>>, vector<8x256xf32>
    %cst_64 = arith.constant dense<0.000000e+00> : vector<8x256xf32>
    %241 = tpu.matmul %236, %17, %cst_64 {dimension_numbers = #tpu.dot_dimension_numbers<[1], [0], [0], [1], [0, 0, 1, 1], [], []>} : vector<8x64xf32>, vector<64x256xf32>, vector<8x256xf32> -> vector<8x256xf32>
    %242 = arith.addf %240, %241 : vector<8x256xf32>
    %243 = vector.extract_strided_slice %242 {offsets = [0, 0], sizes = [8, 64], strides = [1, 1]} : vector<8x256xf32> to vector<8x64xf32>
    %244 = arith.negf %243 : vector<8x64xf32>
    %245 = math.exp %244 : vector<8x64xf32>
    %cst_65 = arith.constant 1.000000e+00 : f32
    %246 = vector.broadcast %cst_65 : f32 to vector<8x64xf32>
    %247 = arith.addf %246, %245 : vector<8x64xf32>
    %248 = arith.divf %246, %247 : vector<8x64xf32>
    %249 = vector.extract_strided_slice %242 {offsets = [0, 64], sizes = [8, 64], strides = [1, 1]} : vector<8x256xf32> to vector<8x64xf32>
    %250 = arith.negf %249 : vector<8x64xf32>
    %251 = math.exp %250 : vector<8x64xf32>
    %cst_66 = arith.constant 1.000000e+00 : f32
    %252 = vector.broadcast %cst_66 : f32 to vector<8x64xf32>
    %253 = arith.addf %252, %251 : vector<8x64xf32>
    %254 = arith.divf %252, %253 : vector<8x64xf32>
    %255 = vector.extract_strided_slice %242 {offsets = [0, 128], sizes = [8, 64], strides = [1, 1]} : vector<8x256xf32> to vector<8x64xf32>
    %256 = math.tanh %255 : vector<8x64xf32>
    %257 = vector.extract_strided_slice %242 {offsets = [0, 192], sizes = [8, 64], strides = [1, 1]} : vector<8x256xf32> to vector<8x64xf32>
    %258 = arith.negf %257 : vector<8x64xf32>
    %259 = math.exp %258 : vector<8x64xf32>
    %cst_67 = arith.constant 1.000000e+00 : f32
    %260 = vector.broadcast %cst_67 : f32 to vector<8x64xf32>
    %261 = arith.addf %260, %259 : vector<8x64xf32>
    %262 = arith.divf %260, %261 : vector<8x64xf32>
    %263 = arith.mulf %254, %234 : vector<8x64xf32>
    %264 = arith.mulf %248, %256 : vector<8x64xf32>
    %265 = arith.addf %263, %264 : vector<8x64xf32>
    %266 = math.tanh %265 : vector<8x64xf32>
    %267 = arith.mulf %262, %266 : vector<8x64xf32>
    %c8_i32_68 = arith.constant 8 : i32
    %c0_69 = arith.constant 0 : index
    %c0_70 = arith.constant 0 : index
    %268 = vector.load %arg9[%c0_69, %c0_70] : memref<8x64xf32, #tpu.memory_space<vmem>>, vector<8x64xf32>
    tpu.vector_store %arg9[%c0_69, %c0_70], %267 {strides = array<i32>} : memref<8x64xf32, #tpu.memory_space<vmem>>, vector<8x64xf32>,
    %c0_71 = arith.constant 0 : index
    %c0_72 = arith.constant 0 : index
    %269 = vector.load %arg10[%c0_71, %c0_72] : memref<8x64xf32, #tpu.memory_space<vmem>>, vector<8x64xf32>
    tpu.vector_store %arg10[%c0_71, %c0_72], %265 {strides = array<i32>} : memref<8x64xf32, #tpu.memory_space<vmem>>, vector<8x64xf32>,
    %c1_i32_73 = arith.constant 1 : i32
    %270 = arith.cmpi eq, %arg0, %c1_i32_73 : i32
    %271 = arith.extui %270 : i1 to i32
    %c0_i32_74 = arith.constant 0 : i32
    %272 = arith.cmpi ne, %271, %c0_i32_74 : i32
    scf.if %272 {
      %c0_75 = arith.constant 0 : index
      %c0_76 = arith.constant 0 : index
      %273 = vector.load %arg7[%c0_75, %c0_76] : memref<8x128xf32, #tpu.memory_space<vmem>>, vector<8x64xf32>
      tpu.vector_store %arg7[%c0_75, %c0_76], %267 {strides = array<i32>} : memref<8x128xf32, #tpu.memory_space<vmem>>, vector<8x64xf32>,
      %c0_77 = arith.constant 0 : index
      %c64 = arith.constant 64 : index
      %274 = vector.load %arg7[%c0_77, %c64] : memref<8x128xf32, #tpu.memory_space<vmem>>, vector<8x64xf32>
      tpu.vector_store %arg7[%c0_77, %c64], %265 {strides = array<i32>} : memref<8x128xf32, #tpu.memory_space<vmem>>, vector<8x64xf32>,
    } else {
    }
    return
  }
  func.func @transform_0(%arg0: i32) -> (i32, i32) {
    %c0_i32 = arith.constant 0 : i32
    %c0_i32_0 = arith.constant 0 : i32
    return %arg0, %c0_i32 : i32, i32
  }
  func.func @transform_1(%arg0: i32) -> (i32, i32) {
    %c0_i32 = arith.constant 0 : i32
    %c0_i32_0 = arith.constant 0 : i32
    %c0_i32_1 = arith.constant 0 : i32
    return %c0_i32, %c0_i32_0 : i32, i32
  }
  func.func @transform_2(%arg0: i32) -> (i32, i32) {
    %c0_i32 = arith.constant 0 : i32
    %c0_i32_0 = arith.constant 0 : i32
    %c0_i32_1 = arith.constant 0 : i32
    return %c0_i32, %c0_i32_0 : i32, i32
  }
  func.func @transform_3(%arg0: i32) -> (i32, i32) {
    %c0_i32 = arith.constant 0 : i32
    %c0_i32_0 = arith.constant 0 : i32
    %c0_i32_1 = arith.constant 0 : i32
    return %c0_i32, %c0_i32_0 : i32, i32
  }
  func.func @transform_4(%arg0: i32) -> (i32, i32) {
    %c0_i32 = arith.constant 0 : i32
    %c0_i32_0 = arith.constant 0 : i32
    %c0_i32_1 = arith.constant 0 : i32
    return %c0_i32, %c0_i32_0 : i32, i32
  }
  func.func @transform_5(%arg0: i32) -> (i32, i32) {
    %c0_i32 = arith.constant 0 : i32
    %c0_i32_0 = arith.constant 0 : i32
    %c0_i32_1 = arith.constant 0 : i32
    return %c0_i32, %c0_i32_0 : i32, i32
  }
  func.func @transform_6(%arg0: i32) -> (i32, i32) {
    %c0_i32 = arith.constant 0 : i32
    %c0_i32_0 = arith.constant 0 : i32
    %c0_i32_1 = arith.constant 0 : i32
    return %c0_i32, %c0_i32_0 : i32, i32
  }
}

</mosaic_0001>

<llo_original>
// kernel: tpu_custom_call.1
$region0: #{tpu_custom_call.1}
  #allocation0 [shape = 'u32[]', space=smem, size = 0x4, offset = 0x4, fixed_abs, tag = 'smem constant byte address 0x4 - core index']
  #allocation1 [shape = 'u32[144,128]{1,0:T(1,128)}', space=vmem, size = 0x12000, scoped, tag = 'internal scratch']
  #allocation2 [shape = 'f32[64,256]{1,0:T(8,128)}', space=vmem, size = 0x10000, scoped, tag = 'scratch operand']
  #allocation3 [shape = 'f32[8,64]{1,0:T(8,128)}', space=vmem, size = 0x1000, scoped, tag = 'scratch operand']
  #allocation4 [shape = 'f32[8,64]{1,0:T(8,128)}', space=vmem, size = 0x1000, scoped, tag = 'scratch operand']
  %s0 = inlined_call_operand.vmem [shape: f32[128,96], index: 0, kind: input, shape index: {}]
  %s1 = inlined_call_operand.vmem [shape: f32[96,64], index: 1, kind: input, shape index: {}]
  %s2 = inlined_call_operand.vmem [shape: f32[1,64], index: 2, kind: input, shape index: {}]
  %s3 = inlined_call_operand.vmem [shape: f32[64,256], index: 3, kind: input, shape index: {}]
  %s4 = inlined_call_operand.vmem [shape: f32[1,256], index: 4, kind: input, shape index: {}]
  %s5 = inlined_call_operand.vmem [shape: f32[64,256], index: 5, kind: input, shape index: {}]
  %s6 = inlined_call_operand.hbm [shape: f32[8,128], index: 6, kind: output, shape index: {}]
  %s7 = sld [smem:[#allocation0]]
  $region65: #{tpu_custom_call.1} parent=0
    _
  %s9 = ssub.s32 1, %s7
  %s10 = scalar_select 0, %s9, %s7
  $region1: #{tpu_custom_call.1} parent=0
    #allocation5 [shape = 'u8[4096]{0}', space=vmem, size = 0x1000, scoped, tag = 'output window, operand 0, single buffered']
    #allocation6 [shape = 's32[2]{0}', space=sflag, size = 0x8, scoped, tag = 'scoped memory for tpu_custom_call.1']
    %11 = vsyncpa [#allocation6], 0
    loop: start=0, step=1, limit=4
    $region2: #{tpu_custom_call.1} parent=1 // loop_pre_header
      _
    $region3: #{tpu_custom_call.1} parent=1 // loop_header
      %s13 = sphi 0, %s17
      %p14 = scmp.ge.s32.totalorder %s13, 4
      %s23 = sphi 0, %s25
      %s26 = sphi 0, %s23
      %s27 = sphi 0, %s26
      %s43 = sphi 0, %s27
      %s47 = sphi 0, %s47
      %s49 = sphi 0, %s47
      %s50 = sphi 0, %s49
      %s64 = sphi 0, %s50
      %s68 = sphi 0, %s68
      %s70 = sphi 0, %s68
      %s71 = sphi 0, %s70
      %s85 = sphi 0, %s71
      %s89 = sphi 0, %s89
      %s91 = sphi 0, %s89
      %s92 = sphi 0, %s91
      %s106 = sphi 0, %s92
      %s110 = sphi 0, %s110
      %s112 = sphi 0, %s110
      %s113 = sphi 0, %s112
      %s127 = sphi 0, %s113
      %s131 = sphi 0, %s131
      %s133 = sphi 0, %s131
      %s134 = sphi 0, %s133
      %s148 = sphi 0, %s134
      %s152 = sphi 0, %s152
      %s154 = sphi 0, %s152
      %s155 = sphi 0, %s154
      %s169 = sphi 0, %s155
    $region4: #{tpu_custom_call.1} parent=1 // loop_header_branch
      %16 = sbr.rel (%p14) target = $region8
    $region5: #{tpu_custom_call.1} parent=1 // loop_body
      %s18 = ssub.s32 %s13, 1
      %s19 = ssub.s32 %s13, 2
      %s20 = sadd.s32 %s13, 1
      %s21 = ssub.s32 %s13, %s20
      %p22 = scmp.eq.s32.totalorder %s21, 0
      %s24 = sadd.s32 %s23, 1
      %s25 = scalar_select %p22, %s23, %s24
      %p28 = pneg %p22
      %p29 = scmp.eq.s32.totalorder %s13, 1
      %p30 = por %p28, %p29
      %p31 = scmp.ne.s32.totalorder %s23, %s26
      %p32 = scmp.eq.s32.totalorder %s13, 0
      %p33 = por %p31, %p32
      %p34 = scmp.ne.s32.totalorder %s23, %s26
      %p35 = scmp.eq.s32.totalorder %s18, 1
      %p36 = por %p34, %p35
      %p37 = scmp.ne.s32.totalorder %s26, %s27
      %p38 = scmp.eq.s32.totalorder %s18, 0
      %p39 = por %p37, %p38
      %p40 = scmp.ne.s32.totalorder %s26, %s27
      %p41 = scmp.eq.s32.totalorder %s19, 1
      %p42 = por %p40, %p41
      %p44 = scmp.ne.s32.totalorder %s27, %s43
      %p45 = scmp.eq.s32.totalorder %s19, 0
      %p46 = por %p44, %p45
      %s48 = sadd.s32 %s47, 1
      %p51 = scmp.eq.s32.totalorder %s13, 1
      %p52 = scmp.ne.s32.totalorder %s47, %s49
      %p53 = scmp.eq.s32.totalorder %s13, 0
      %p54 = por %p52, %p53
      %p55 = scmp.ne.s32.totalorder %s47, %s49
      %p56 = scmp.eq.s32.totalorder %s18, 1
      %p57 = por %p55, %p56
      %p58 = scmp.ne.s32.totalorder %s49, %s50
      %p59 = scmp.eq.s32.totalorder %s18, 0
      %p60 = por %p58, %p59
      %p61 = scmp.ne.s32.totalorder %s49, %s50
      %p62 = scmp.eq.s32.totalorder %s19, 1
      %p63 = por %p61, %p62
      %p65 = scmp.ne.s32.totalorder %s50, %s64
      %p66 = scmp.eq.s32.totalorder %s19, 0
      %p67 = por %p65, %p66
      %s69 = sadd.s32 %s68, 1
      %p72 = scmp.eq.s32.totalorder %s13, 1
      %p73 = scmp.ne.s32.totalorder %s68, %s70
      %p74 = scmp.eq.s32.totalorder %s13, 0
      %p75 = por %p73, %p74
      %p76 = scmp.ne.s32.totalorder %s68, %s70
      %p77 = scmp.eq.s32.totalorder %s18, 1
      %p78 = por %p76, %p77
      %p79 = scmp.ne.s32.totalorder %s70, %s71
      %p80 = scmp.eq.s32.totalorder %s18, 0
      %p81 = por %p79, %p80
      %p82 = scmp.ne.s32.totalorder %s70, %s71
      %p83 = scmp.eq.s32.totalorder %s19, 1
      %p84 = por %p82, %p83
      %p86 = scmp.ne.s32.totalorder %s71, %s85
      %p87 = scmp.eq.s32.totalorder %s19, 0
      %p88 = por %p86, %p87
      %s90 = sadd.s32 %s89, 1
      %p93 = scmp.eq.s32.totalorder %s13, 1
      %p94 = scmp.ne.s32.totalorder %s89, %s91
      %p95 = scmp.eq.s32.totalorder %s13, 0
      %p96 = por %p94, %p95
      %p97 = scmp.ne.s32.totalorder %s89, %s91
      %p98 = scmp.eq.s32.totalorder %s18, 1
      %p99 = por %p97, %p98
      %p100 = scmp.ne.s32.totalorder %s91, %s92
      %p101 = scmp.eq.s32.totalorder %s18, 0
      %p102 = por %p100, %p101
      %p103 = scmp.ne.s32.totalorder %s91, %s92
      %p104 = scmp.eq.s32.totalorder %s19, 1
      %p105 = por %p103, %p104
      %p107 = scmp.ne.s32.totalorder %s92, %s106
      %p108 = scmp.eq.s32.totalorder %s19, 0
      %p109 = por %p107, %p108
      %s111 = sadd.s32 %s110, 1
      %p114 = scmp.eq.s32.totalorder %s13, 1
      %p115 = scmp.ne.s32.totalorder %s110, %s112
      %p116 = scmp.eq.s32.totalorder %s13, 0
      %p117 = por %p115, %p116
      %p118 = scmp.ne.s32.totalorder %s110, %s112
      %p119 = scmp.eq.s32.totalorder %s18, 1
      %p120 = por %p118, %p119
      %p121 = scmp.ne.s32.totalorder %s112, %s113
      %p122 = scmp.eq.s32.totalorder %s18, 0
      %p123 = por %p121, %p122
      %p124 = scmp.ne.s32.totalorder %s112, %s113
      %p125 = scmp.eq.s32.totalorder %s19, 1
      %p126 = por %p124, %p125
      %p128 = scmp.ne.s32.totalorder %s113, %s127
      %p129 = scmp.eq.s32.totalorder %s19, 0
      %p130 = por %p128, %p129
      %s132 = sadd.s32 %s131, 1
      %p135 = scmp.eq.s32.totalorder %s13, 1
      %p136 = scmp.ne.s32.totalorder %s131, %s133
      %p137 = scmp.eq.s32.totalorder %s13, 0
      %p138 = por %p136, %p137
      %p139 = scmp.ne.s32.totalorder %s131, %s133
      %p140 = scmp.eq.s32.totalorder %s18, 1
      %p141 = por %p139, %p140
      %p142 = scmp.ne.s32.totalorder %s133, %s134
      %p143 = scmp.eq.s32.totalorder %s18, 0
      %p144 = por %p142, %p143
      %p145 = scmp.ne.s32.totalorder %s133, %s134
      %p146 = scmp.eq.s32.totalorder %s19, 1
      %p147 = por %p145, %p146
      %p149 = scmp.ne.s32.totalorder %s134, %s148
      %p150 = scmp.eq.s32.totalorder %s19, 0
      %p151 = por %p149, %p150
      %s153 = sadd.s32 %s152, 1
      %p156 = scmp.eq.s32.totalorder %s13, 1
      %p157 = scmp.ne.s32.totalorder %s152, %s154
      %p158 = scmp.eq.s32.totalorder %s13, 0
      %p159 = por %p157, %p158
      %p160 = scmp.ne.s32.totalorder %s152, %s154
      %p161 = scmp.eq.s32.totalorder %s18, 1
      %p162 = por %p160, %p161
      %p163 = scmp.ne.s32.totalorder %s154, %s155
      %p164 = scmp.eq.s32.totalorder %s18, 0
      %p165 = por %p163, %p164
      %p166 = scmp.ne.s32.totalorder %s154, %s155
      %p167 = scmp.eq.s32.totalorder %s19, 1
      %p168 = por %p166, %p167
      %p170 = scmp.ne.s32.totalorder %s155, %s169
      %p171 = scmp.eq.s32.totalorder %s19, 0
      %p172 = por %p170, %p171
      %p173 = scmp.le.s32.totalorder 1, %s13
      %p174 = scmp.lt.s32.totalorder %s13, 3
      %p175 = pnand %p173, %p174
      %p176 = pneg %p175
      // Predicated region
      $region9: #{tpu_custom_call.1} parent=5 // pred_check
        _
      $region10: #{tpu_custom_call.1} parent=5 // pred_check_branch
        %178 = sbr.rel (%p175) target = $region12
      $region11: #{tpu_custom_call.1} parent=5 // pred_region
        %s179 = ssub.s32 %s13, 1
        // Predicated region
        $region13: #{tpu_custom_call.1} parent=11 // pred_check
          %p180 = pneg %p60
        $region14: #{tpu_custom_call.1} parent=11 // pred_check_branch
          %182 = sbr.rel (%p180) target = $region16
        $region15: #{tpu_custom_call.1} parent=11 // pred_region
          _
        $region16: #{tpu_custom_call.1} parent=11 // pred_fallthru
          _
        // Predicated region
        $region17: #{tpu_custom_call.1} parent=11 // pred_check
          %p183 = pneg %p81
        $region18: #{tpu_custom_call.1} parent=11 // pred_check_branch
          %185 = sbr.rel (%p183) target = $region20
        $region19: #{tpu_custom_call.1} parent=11 // pred_region
          _
        $region20: #{tpu_custom_call.1} parent=11 // pred_fallthru
          _
        // Predicated region
        $region21: #{tpu_custom_call.1} parent=11 // pred_check
          %p186 = pneg %p102
        $region22: #{tpu_custom_call.1} parent=11 // pred_check_branch
          %188 = sbr.rel (%p186) target = $region24
        $region23: #{tpu_custom_call.1} parent=11 // pred_region
          _
        $region24: #{tpu_custom_call.1} parent=11 // pred_fallthru
          _
        // Predicated region
        $region25: #{tpu_custom_call.1} parent=11 // pred_check
          %p189 = pneg %p123
        $region26: #{tpu_custom_call.1} parent=11 // pred_check_branch
          %191 = sbr.rel (%p189) target = $region28
        $region27: #{tpu_custom_call.1} parent=11 // pred_region
          _
        $region28: #{tpu_custom_call.1} parent=11 // pred_fallthru
          _
        // Predicated region
        $region29: #{tpu_custom_call.1} parent=11 // pred_check
          %p192 = pneg %p144
        $region30: #{tpu_custom_call.1} parent=11 // pred_check_branch
          %194 = sbr.rel (%p192) target = $region32
        $region31: #{tpu_custom_call.1} parent=11 // pred_region
          _
        $region32: #{tpu_custom_call.1} parent=11 // pred_fallthru
          _
      $region12: #{tpu_custom_call.1} parent=5 // pred_fallthru
        _
      %p195 = scmp.lt.s32.totalorder %s13, 2
      // Predicated region
      $region33: #{tpu_custom_call.1} parent=5 // pred_check
        %p196 = pneg %p195
      $region34: #{tpu_custom_call.1} parent=5 // pred_check_branch
        %198 = sbr.rel (%p196) target = $region36
      $region35: #{tpu_custom_call.1} parent=5 // pred_region
        // Predicated region
        $region37: #{tpu_custom_call.1} parent=35 // pred_check
          %p199 = pneg %p33
        $region38: #{tpu_custom_call.1} parent=35 // pred_check_branch
          %201 = sbr.rel (%p199) target = $region40
        $region39: #{tpu_custom_call.1} parent=35 // pred_region
          %s202 = smul.u32 8, %s13
          %p203 = scmp.lt.s32.totalorder %s202, 15
          %s204 = scalar_select %p203, %s202, 15
          %s205 = smul.addr %s204, 8
          %s206 = scalar_lea.vmem %s0, %s205
          %s207 = smul.u32 8, %s13
        $region40: #{tpu_custom_call.1} parent=35 // pred_fallthru
          _
      $region36: #{tpu_custom_call.1} parent=5 // pred_fallthru
        _
      %p208 = scmp.le.s32.totalorder 1, %s13
      %p209 = scmp.lt.s32.totalorder %s13, 3
      %p210 = pnand %p208, %p209
      %p211 = pneg %p210
      // Predicated region
      $region41: #{tpu_custom_call.1} parent=5 // pred_check
        _
      $region42: #{tpu_custom_call.1} parent=5 // pred_check_branch
        %213 = sbr.rel (%p210) target = $region44
      $region43: #{tpu_custom_call.1} parent=5 // pred_region
        %s214 = ssub.s32 %s13, 1
        %s215 = smul.u32 8, %s18
        %p216 = scmp.lt.s32.totalorder %s215, 15
        %s217 = scalar_select %p216, %s215, 15
        %s218 = smul.addr %s217, 8
        %s219 = scalar_lea.vmem %s0, %s218
        %p220 = pneg %p39
        %p221 = pneg %p36
        %p222 = pneg %p60
        %p223 = pneg %p57
        %p224 = pneg %p81
        %p225 = pneg %p78
        %p226 = pneg %p102
        %p227 = pneg %p99
        %p228 = pneg %p123
        %p229 = pneg %p120
        %p230 = pneg %p144
        %p231 = pneg %p141
        %p232 = pneg %p165
        %p233 = pneg %p162
        %s234 = smul.u32 8, %s18
        %p235 = scmp.lt.s32.totalorder %s234, 15
        %s236 = scalar_select %p235, %s234, 15
        %s237 = smul.addr %s236, 8
        %s238 = scalar_lea.vmem %s0, %s237
        %s239 = smul.u32 8, %s18
        %p240 = scmp.eq.s32.totalorder %s18, 0
        // Predicated region
        $region45: #{tpu_custom_call.1} parent=43 // pred_check
          %p241 = pneg %p240
        $region46: #{tpu_custom_call.1} parent=43 // pred_check_branch
          %243 = sbr.rel (%p241) target = $region48
        $region47: #{tpu_custom_call.1} parent=43 // pred_region
          %vm244 = vcmask 523264
          %245 = vst.msk [vmem:[#allocation3] sm:$0xff] %vm244, 0.0
          %246 = vst.msk [vmem:[#allocation4] sm:$0xff] %vm244, 0.0
        $region48: #{tpu_custom_call.1} parent=43 // pred_fallthru
          _
        %v247 = vld [vmem:[%s238] sm:$0xff]
        %v248 = vld [vmem:[%s238 + $0x8] sm:$0xff]
        %v249 = vld [vmem:[%s238 + $0x10] sm:$0xff]
        %v250 = vld [vmem:[%s238 + $0x18] sm:$0xff]
        %v251 = vld [vmem:[%s238 + $0x20] sm:$0xff]
        %v252 = vld [vmem:[%s238 + $0x28] sm:$0xff]
        %v253 = vld [vmem:[%s238 + $0x30] sm:$0xff]
        %v254 = vld [vmem:[%s238 + $0x38] sm:$0xff]
        %v255 = vld [vmem:[%s1] sm:$0xff]
        %v256 = vld [vmem:[%s1 + $0x8] sm:$0xff]
        %v257 = vld [vmem:[%s1 + $0x10] sm:$0xff]
        %v258 = vld [vmem:[%s1 + $0x18] sm:$0xff]
        %v259 = vld [vmem:[%s1 + $0x20] sm:$0xff]
        %v260 = vld [vmem:[%s1 + $0x28] sm:$0xff]
        %v261 = vld [vmem:[%s1 + $0x30] sm:$0xff]
        %v262 = vld [vmem:[%s1 + $0x38] sm:$0xff]
        %v263 = vld [vmem:[%s1 + $0x40] sm:$0xff]
        %v264 = vld [vmem:[%s1 + $0x48] sm:$0xff]
        %v265 = vld [vmem:[%s1 + $0x50] sm:$0xff]
        %v266 = vld [vmem:[%s1 + $0x58] sm:$0xff]
        %v267 = vld [vmem:[%s2] sm:$0x1]
        %v269 = vlaneseq
        %v270 = vshrl.u32 %v269, 7
        %v271 = vsub.s32 0, %v270
        %v272 = vrot.slane %v267, %v271
        %vm274 = vcmask 785408
        %v276 = vsel %vm274, %v247, 0
        %v279 = vsel %vm274, %v248, 0
        %v282 = vsel %vm274, %v249, 0
        %v285 = vsel %vm274, %v250, 0
        %v288 = vsel %vm274, %v251, 0
        %v291 = vsel %vm274, %v252, 0
        %v294 = vsel %vm274, %v253, 0
        %v297 = vsel %vm274, %v254, 0
        %299 = vmatprep.subr.mxu0 0.0
        %300 = vmatpush1.msra.mxu0 %v255
        %301 = vmatprep.subr.mxu0 0.0
        %302 = vmatpush1.msra.mxu0 %v256
        %303 = vmatprep.subr.mxu0 0.0
        %304 = vmatpush1.msra.mxu0 %v257
        %305 = vmatprep.subr.mxu0 0.0
        %306 = vmatpush1.msra.mxu0 %v258
        %307 = vmatprep.subr.mxu0 0.0
        %308 = vmatpush1.msra.mxu0 %v259
        %309 = vmatprep.subr.mxu0 0.0
        %310 = vmatpush1.msra.mxu0 %v260
        %311 = vmatprep.subr.mxu0 0.0
        %312 = vmatpush1.msra.mxu0 %v261
        %313 = vmatprep.subr.mxu0 0.0
        %314 = vmatpush1.msra.mxu0 %v262
        %315 = vmatprep.subr.mxu0 0.0
        %316 = vmatpush1.msra.mxu0 %v263
        %317 = vmatprep.subr.mxu0 0.0
        %318 = vmatpush1.msra.mxu0 %v264
        %319 = vmatprep.subr.mxu0 0.0
        %320 = vmatpush1.msra.mxu0 %v265
        %321 = vmatprep.subr.mxu0 0.0
        %322 = vmatpush1.msra.mxu0 %v266
        %323 = vmatprep.subr.mxu0 0.0
        %324 = vmatpush1.msra.mxu0 0.0
        %325 = vmatprep.subr.mxu0 0.0
        %326 = vmatpush1.msra.mxu0 0.0
        %327 = vmatprep.subr.mxu0 0.0
        %328 = vmatpush1.msra.mxu0 0.0
        %329 = vmatprep.subr.mxu0 0.0
        %330 = vmatpush1.msra.mxu0 0.0
        %331 = vmatprep.subr.mxu0 0.0
        %332 = vmatpush1.msra.mxu0 0.0
        %333 = vmatprep.subr.mxu0 0.0
        %334 = vmatpush1.msra.mxu0 0.0
        %335 = vmatprep.subr.mxu0 0.0
        %336 = vmatpush1.msra.mxu0 0.0
        %337 = vmatprep.subr.mxu0 0.0
        %338 = vmatpush1.msra.mxu0 0.0
        %339 = vmatprep.subr.mxu0 0.0
        %340 = vmatpush1.msra.mxu0 0.0
        %341 = vmatprep.subr.mxu0 0.0
        %342 = vmatpush1.msra.mxu0 0.0
        %343 = vmatprep.subr.mxu0 0.0
        %344 = vmatpush1.msra.mxu0 0.0
        %345 = vmatprep.subr.mxu0 0.0
        %346 = vmatpush1.msra.mxu0 0.0
        %347 = vmatprep.subr.mxu0 0.0
        %348 = vmatpush1.msra.mxu0 0.0
        %349 = vmatprep.subr.mxu0 0.0
        %350 = vmatpush1.msra.mxu0 0.0
        %351 = vmatprep.subr.mxu0 0.0
        %352 = vmatpush1.msra.mxu0 0.0
        %353 = vmatprep.subr.mxu0 0.0
        %354 = vmatpush1.msra.mxu0 0.0
        %355 = vmatprep.subr.mxu0 0.0
        %356 = vmatpush1.msra.mxu0 0.0
        %357 = vmatprep.subr.mxu0 0.0
        %358 = vmatpush1.msra.mxu0 0.0
        %359 = vmatprep.subr.mxu0 0.0
        %360 = vmatpush1.msra.mxu0 0.0
        %361 = vmatprep.subr.mxu0 0.0
        %362 = vmatpush1.msra.mxu0 0.0
        %363 = vmatprep.mubr.f32.mxu0 0.0
        %364 = vmatmul.mubr.f32.gmra.mrb[0].mxu0 %v276
        %v365 = vpop.f32.mrb[0].mxu0
        %v366 = vadd.f32 %v272, %v365
        %v367 = vpop.f32.mrb[0].mxu0
        %368 = vmatprep.mubr.f32.mxu0 0.0
        %369 = vmatmul.mubr.f32.gmra.mrb[0].mxu0 %v279
        %v370 = vpop.f32.mrb[0].mxu0
        %v371 = vadd.f32 %v272, %v370
        %v372 = vpop.f32.mrb[0].mxu0
        %373 = vmatprep.mubr.f32.mxu0 0.0
        %374 = vmatmul.mubr.f32.gmra.mrb[0].mxu0 %v282
        %v375 = vpop.f32.mrb[0].mxu0
        %v376 = vadd.f32 %v272, %v375
        %v377 = vpop.f32.mrb[0].mxu0
        %378 = vmatprep.mubr.f32.mxu0 0.0
        %379 = vmatmul.mubr.f32.gmra.mrb[0].mxu0 %v285
        %v380 = vpop.f32.mrb[0].mxu0
        %v381 = vadd.f32 %v272, %v380
        %v382 = vpop.f32.mrb[0].mxu0
        %383 = vmatprep.mubr.f32.mxu0 0.0
        %384 = vmatmul.mubr.f32.gmra.mrb[0].mxu0 %v288
        %v385 = vpop.f32.mrb[0].mxu0
        %v386 = vadd.f32 %v272, %v385
        %v387 = vpop.f32.mrb[0].mxu0
        %388 = vmatprep.mubr.f32.mxu0 0.0
        %389 = vmatmul.mubr.f32.gmra.mrb[0].mxu0 %v291
        %v390 = vpop.f32.mrb[0].mxu0
        %v391 = vadd.f32 %v272, %v390
        %v392 = vpop.f32.mrb[0].mxu0
        %393 = vmatprep.mubr.f32.mxu0 0.0
        %394 = vmatmul.mubr.f32.gmra.mrb[0].mxu0 %v294
        %v395 = vpop.f32.mrb[0].mxu0
        %v396 = vadd.f32 %v272, %v395
        %v397 = vpop.f32.mrb[0].mxu0
        %398 = vmatprep.mubr.f32.mxu0 0.0
        %399 = vmatmul.mubr.f32.gmra.mrb[0].mxu0 %v297
        %v400 = vpop.f32.mrb[0].mxu0
        %v401 = vadd.f32 %v272, %v400
        %v402 = vpop.f32.mrb[0].mxu0
        %403 = vdwg.mxu0
        %v404 = vmax.f32 %v366, 0.0
        %v405 = vmax.f32 %v371, 0.0
        %v406 = vmax.f32 %v376, 0.0
        %v407 = vmax.f32 %v381, 0.0
        %v408 = vmax.f32 %v386, 0.0
        %v409 = vmax.f32 %v391, 0.0
        %v410 = vmax.f32 %v396, 0.0
        %v411 = vmax.f32 %v401, 0.0
        %v412 = vld [vmem:[%s3] sm:$0xff]
        %v413 = vld [vmem:[%s3 + $0x8] sm:$0xff]
        %v414 = vld [vmem:[%s3 + $0x10] sm:$0xff]
        %v415 = vld [vmem:[%s3 + $0x18] sm:$0xff]
        %v416 = vld [vmem:[%s3 + $0x20] sm:$0xff]
        %v417 = vld [vmem:[%s3 + $0x28] sm:$0xff]
        %v418 = vld [vmem:[%s3 + $0x30] sm:$0xff]
        %v419 = vld [vmem:[%s3 + $0x38] sm:$0xff]
        %v420 = vld [vmem:[%s3 + $0x40] sm:$0xff]
        %v421 = vld [vmem:[%s3 + $0x48] sm:$0xff]
        %v422 = vld [vmem:[%s3 + $0x50] sm:$0xff]
        %v423 = vld [vmem:[%s3 + $0x58] sm:$0xff]
        %v424 = vld [vmem:[%s3 + $0x60] sm:$0xff]
        %v425 = vld [vmem:[%s3 + $0x68] sm:$0xff]
        %v426 = vld [vmem:[%s3 + $0x70] sm:$0xff]
        %v427 = vld [vmem:[%s3 + $0x78] sm:$0xff]
        %v428 = vld [vmem:[%s4] sm:$0x3]
        %v430 = vlaneseq
        %v431 = vshrl.u32 %v430, 7
        %v432 = vsub.s32 0, %v431
        %v433 = vrot.slane %v428, %v432
        %v434 = vlaneseq
        %v435 = vshrl.u32 %v434, 7
        %v436 = vsub.s32 1, %v435
        %v437 = vrot.slane %v428, %v436
        %vm440 = vcmask 523264
        %v442 = vsel %vm440, %v404, 0
        %v445 = vsel %vm440, %v405, 0
        %v448 = vsel %vm440, %v406, 0
        %v451 = vsel %vm440, %v407, 0
        %v454 = vsel %vm440, %v408, 0
        %v457 = vsel %vm440, %v409, 0
        %v460 = vsel %vm440, %v410, 0
        %v463 = vsel %vm440, %v411, 0
        %465 = vmatprep.subr.mxu0 %v413
        %466 = vmatpush1.msra.mxu0 %v412
        %467 = vmatprep.subr.mxu0 %v415
        %468 = vmatpush1.msra.mxu0 %v414
        %469 = vmatprep.subr.mxu0 %v417
        %470 = vmatpush1.msra.mxu0 %v416
        %471 = vmatprep.subr.mxu0 %v419
        %472 = vmatpush1.msra.mxu0 %v418
        %473 = vmatprep.subr.mxu0 %v421
        %474 = vmatpush1.msra.mxu0 %v420
        %475 = vmatprep.subr.mxu0 %v423
        %476 = vmatpush1.msra.mxu0 %v422
        %477 = vmatprep.subr.mxu0 %v425
        %478 = vmatpush1.msra.mxu0 %v424
        %479 = vmatprep.subr.mxu0 %v427
        %480 = vmatpush1.msra.mxu0 %v426
        %481 = vmatprep.subr.mxu0 0.0
        %482 = vmatpush1.msra.mxu0 0.0
        %483 = vmatprep.subr.mxu0 0.0
        %484 = vmatpush1.msra.mxu0 0.0
        %485 = vmatprep.subr.mxu0 0.0
        %486 = vmatpush1.msra.mxu0 0.0
        %487 = vmatprep.subr.mxu0 0.0
        %488 = vmatpush1.msra.mxu0 0.0
        %489 = vmatprep.subr.mxu0 0.0
        %490 = vmatpush1.msra.mxu0 0.0
        %491 = vmatprep.subr.mxu0 0.0
        %492 = vmatpush1.msra.mxu0 0.0
        %493 = vmatprep.subr.mxu0 0.0
        %494 = vmatpush1.msra.mxu0 0.0
        %495 = vmatprep.subr.mxu0 0.0
        %496 = vmatpush1.msra.mxu0 0.0
        %497 = vmatprep.subr.mxu0 0.0
        %498 = vmatpush1.msra.mxu0 0.0
        %499 = vmatprep.subr.mxu0 0.0
        %500 = vmatpush1.msra.mxu0 0.0
        %501 = vmatprep.subr.mxu0 0.0
        %502 = vmatpush1.msra.mxu0 0.0
        %503 = vmatprep.subr.mxu0 0.0
        %504 = vmatpush1.msra.mxu0 0.0
        %505 = vmatprep.subr.mxu0 0.0
        %506 = vmatpush1.msra.mxu0 0.0
        %507 = vmatprep.subr.mxu0 0.0
        %508 = vmatpush1.msra.mxu0 0.0
        %509 = vmatprep.subr.mxu0 0.0
        %510 = vmatpush1.msra.mxu0 0.0
        %511 = vmatprep.subr.mxu0 0.0
        %512 = vmatpush1.msra.mxu0 0.0
        %513 = vmatprep.subr.mxu0 0.0
        %514 = vmatpush1.msra.mxu0 0.0
        %515 = vmatprep.subr.mxu0 0.0
        %516 = vmatpush1.msra.mxu0 0.0
        %517 = vmatprep.subr.mxu0 0.0
        %518 = vmatpush1.msra.mxu0 0.0
        %519 = vmatprep.subr.mxu0 0.0
        %520 = vmatpush1.msra.mxu0 0.0
        %521 = vmatprep.subr.mxu0 0.0
        %522 = vmatpush1.msra.mxu0 0.0
        %523 = vmatprep.subr.mxu0 0.0
        %524 = vmatpush1.msra.mxu0 0.0
        %525 = vmatprep.subr.mxu0 0.0
        %526 = vmatpush1.msra.mxu0 0.0
        %527 = vmatprep.subr.mxu0 0.0
        %528 = vmatpush1.msra.mxu0 0.0
        %529 = vmatprep.mubr.f32.mxu0 0.0
        %530 = vmatmul.mubr.f32.gmra.mrb[0].mxu0 %v442
        %v531 = vpop.f32.mrb[0].mxu0
        %v532 = vadd.f32 %v433, %v531
        %v533 = vpop.f32.mrb[0].mxu0
        %v534 = vadd.f32 %v437, %v533
        %535 = vmatprep.mubr.f32.mxu0 0.0
        %536 = vmatmul.mubr.f32.gmra.mrb[0].mxu0 %v445
        %v537 = vpop.f32.mrb[0].mxu0
        %v538 = vadd.f32 %v433, %v537
        %v539 = vpop.f32.mrb[0].mxu0
        %v540 = vadd.f32 %v437, %v539
        %541 = vmatprep.mubr.f32.mxu0 0.0
        %542 = vmatmul.mubr.f32.gmra.mrb[0].mxu0 %v448
        %v543 = vpop.f32.mrb[0].mxu0
        %v544 = vadd.f32 %v433, %v543
        %v545 = vpop.f32.mrb[0].mxu0
        %v546 = vadd.f32 %v437, %v545
        %547 = vmatprep.mubr.f32.mxu0 0.0
        %548 = vmatmul.mubr.f32.gmra.mrb[0].mxu0 %v451
        %v549 = vpop.f32.mrb[0].mxu0
        %v550 = vadd.f32 %v433, %v549
        %v551 = vpop.f32.mrb[0].mxu0
        %v552 = vadd.f32 %v437, %v551
        %553 = vmatprep.mubr.f32.mxu0 0.0
        %554 = vmatmul.mubr.f32.gmra.mrb[0].mxu0 %v454
        %v555 = vpop.f32.mrb[0].mxu0
        %v556 = vadd.f32 %v433, %v555
        %v557 = vpop.f32.mrb[0].mxu0
        %v558 = vadd.f32 %v437, %v557
        %559 = vmatprep.mubr.f32.mxu0 0.0
        %560 = vmatmul.mubr.f32.gmra.mrb[0].mxu0 %v457
        %v561 = vpop.f32.mrb[0].mxu0
        %v562 = vadd.f32 %v433, %v561
        %v563 = vpop.f32.mrb[0].mxu0
        %v564 = vadd.f32 %v437, %v563
        %565 = vmatprep.mubr.f32.mxu0 0.0
        %566 = vmatmul.mubr.f32.gmra.mrb[0].mxu0 %v460
        %v567 = vpop.f32.mrb[0].mxu0
        %v568 = vadd.f32 %v433, %v567
        %v569 = vpop.f32.mrb[0].mxu0
        %v570 = vadd.f32 %v437, %v569
        %571 = vmatprep.mubr.f32.mxu0 0.0
        %572 = vmatmul.mubr.f32.gmra.mrb[0].mxu0 %v463
        %v573 = vpop.f32.mrb[0].mxu0
        %v574 = vadd.f32 %v433, %v573
        %v575 = vpop.f32.mrb[0].mxu0
        %v576 = vadd.f32 %v437, %v575
        %577 = vdwg.mxu0
        %578 = vst [vmem:[#allocation2] sm:$0xff] %v532
        %579 = vst [vmem:[#allocation2 + $0x8] sm:$0xff] %v534
        %580 = vst [vmem:[#allocation2 + $0x10] sm:$0xff] %v538
        %581 = vst [vmem:[#allocation2 + $0x18] sm:$0xff] %v540
        %582 = vst [vmem:[#allocation2 + $0x20] sm:$0xff] %v544
        %583 = vst [vmem:[#allocation2 + $0x28] sm:$0xff] %v546
        %584 = vst [vmem:[#allocation2 + $0x30] sm:$0xff] %v550
        %585 = vst [vmem:[#allocation2 + $0x38] sm:$0xff] %v552
        %586 = vst [vmem:[#allocation2 + $0x40] sm:$0xff] %v556
        %587 = vst [vmem:[#allocation2 + $0x48] sm:$0xff] %v558
        %588 = vst [vmem:[#allocation2 + $0x50] sm:$0xff] %v562
        %589 = vst [vmem:[#allocation2 + $0x58] sm:$0xff] %v564
        %590 = vst [vmem:[#allocation2 + $0x60] sm:$0xff] %v568
        %591 = vst [vmem:[#allocation2 + $0x68] sm:$0xff] %v570
        %592 = vst [vmem:[#allocation2 + $0x70] sm:$0xff] %v574
        %593 = vst [vmem:[#allocation2 + $0x78] sm:$0xff] %v576
        %v594 = vld [vmem:[%s5] sm:$0xff]
        %v595 = vld [vmem:[%s5 + $0x8] sm:$0xff]
        %v596 = vld [vmem:[%s5 + $0x10] sm:$0xff]
        %v597 = vld [vmem:[%s5 + $0x18] sm:$0xff]
        %v598 = vld [vmem:[%s5 + $0x20] sm:$0xff]
        %v599 = vld [vmem:[%s5 + $0x28] sm:$0xff]
        %v600 = vld [vmem:[%s5 + $0x30] sm:$0xff]
        %v601 = vld [vmem:[%s5 + $0x38] sm:$0xff]
        %v602 = vld [vmem:[%s5 + $0x40] sm:$0xff]
        %v603 = vld [vmem:[%s5 + $0x48] sm:$0xff]
        %v604 = vld [vmem:[%s5 + $0x50] sm:$0xff]
        %v605 = vld [vmem:[%s5 + $0x58] sm:$0xff]
        %v606 = vld [vmem:[%s5 + $0x60] sm:$0xff]
        %v607 = vld [vmem:[%s5 + $0x68] sm:$0xff]
        %v608 = vld [vmem:[%s5 + $0x70] sm:$0xff]
        %v609 = vld [vmem:[%s5 + $0x78] sm:$0xff]
        %v610 = vld [vmem:[#allocation3] sm:$0xff]
        %v611 = vld [vmem:[#allocation4] sm:$0xff]
        %s612 = smul.u32 0, 2
        %s613 = smul.addr %s612, 8
        %s614 = scalar_lea.vmem [#allocation2], %s613
        %v615 = vld [vmem:[%s614] sm:$0xff]
        %v616 = vld [vmem:[%s614 + $0x8] sm:$0xff]
        %v618 = vsel %vm440, %v610, 0
        %620 = vmatprep.subr.mxu0 %v595
        %621 = vmatpush1.msra.mxu0 %v594
        %622 = vmatprep.subr.mxu0 %v597
        %623 = vmatpush1.msra.mxu0 %v596
        %624 = vmatprep.subr.mxu0 %v599
        %625 = vmatpush1.msra.mxu0 %v598
        %626 = vmatprep.subr.mxu0 %v601
        %627 = vmatpush1.msra.mxu0 %v600
        %628 = vmatprep.subr.mxu0 %v603
        %629 = vmatpush1.msra.mxu0 %v602
        %630 = vmatprep.subr.mxu0 %v605
        %631 = vmatpush1.msra.mxu0 %v604
        %632 = vmatprep.subr.mxu0 %v607
        %633 = vmatpush1.msra.mxu0 %v606
        %634 = vmatprep.subr.mxu0 %v609
        %635 = vmatpush1.msra.mxu0 %v608
        %636 = vmatprep.subr.mxu0 0.0
        %637 = vmatpush1.msra.mxu0 0.0
        %638 = vmatprep.subr.mxu0 0.0
        %639 = vmatpush1.msra.mxu0 0.0
        %640 = vmatprep.subr.mxu0 0.0
        %641 = vmatpush1.msra.mxu0 0.0
        %642 = vmatprep.subr.mxu0 0.0
        %643 = vmatpush1.msra.mxu0 0.0
        %644 = vmatprep.subr.mxu0 0.0
        %645 = vmatpush1.msra.mxu0 0.0
        %646 = vmatprep.subr.mxu0 0.0
        %647 = vmatpush1.msra.mxu0 0.0
        %648 = vmatprep.subr.mxu0 0.0
        %649 = vmatpush1.msra.mxu0 0.0
        %650 = vmatprep.subr.mxu0 0.0
        %651 = vmatpush1.msra.mxu0 0.0
        %652 = vmatprep.subr.mxu0 0.0
        %653 = vmatpush1.msra.mxu0 0.0
        %654 = vmatprep.subr.mxu0 0.0
        %655 = vmatpush1.msra.mxu0 0.0
        %656 = vmatprep.subr.mxu0 0.0
        %657 = vmatpush1.msra.mxu0 0.0
        %658 = vmatprep.subr.mxu0 0.0
        %659 = vmatpush1.msra.mxu0 0.0
        %660 = vmatprep.subr.mxu0 0.0
        %661 = vmatpush1.msra.mxu0 0.0
        %662 = vmatprep.subr.mxu0 0.0
        %663 = vmatpush1.msra.mxu0 0.0
        %664 = vmatprep.subr.mxu0 0.0
        %665 = vmatpush1.msra.mxu0 0.0
        %666 = vmatprep.subr.mxu0 0.0
        %667 = vmatpush1.msra.mxu0 0.0
        %668 = vmatprep.subr.mxu0 0.0
        %669 = vmatpush1.msra.mxu0 0.0
        %670 = vmatprep.subr.mxu0 0.0
        %671 = vmatpush1.msra.mxu0 0.0
        %672 = vmatprep.subr.mxu0 0.0
        %673 = vmatpush1.msra.mxu0 0.0
        %674 = vmatprep.subr.mxu0 0.0
        %675 = vmatpush1.msra.mxu0 0.0
        %676 = vmatprep.subr.mxu0 0.0
        %677 = vmatpush1.msra.mxu0 0.0
        %678 = vmatprep.subr.mxu0 0.0
        %679 = vmatpush1.msra.mxu0 0.0
        %680 = vmatprep.subr.mxu0 0.0
        %681 = vmatpush1.msra.mxu0 0.0
        %682 = vmatprep.subr.mxu0 0.0
        %683 = vmatpush1.msra.mxu0 0.0
        %684 = vmatprep.mubr.f32.mxu0 0.0
        %685 = vmatmul.mubr.f32.gmra.mrb[0].mxu0 %v618
        %v686 = vpop.f32.mrb[0].mxu0
        %v687 = vadd.f32 0.0, %v686
        %v688 = vpop.f32.mrb[0].mxu0
        %v689 = vadd.f32 0.0, %v688
        %690 = vdwg.mxu0
        %v691 = vadd.f32 %v615, %v687
        %v692 = vadd.f32 %v616, %v689
        %v693 = vxor.u32 %v691, 2147483648
        %v694 = vmul.f32 %v693, 1.442695
        %v695 = vpow.pop %v694
        %v696 = vadd.f32 %v695, 1.0
        %v697 = vrcp.pop %v696
        %v698 = vmul.f32 1.0, %v697
        %v699 = vtanh.pop %v692
        %v700 = vxor.u32 %v692, 2147483648
        %v701 = vmul.f32 %v700, 1.442695
        %v702 = vpow.pop %v701
        %v703 = vadd.f32 %v702, 1.0
        %v704 = vrcp.pop %v703
        %v705 = vmul.f32 1.0, %v704
        %707 = vrot.lane.b32.xlu0 %v611, 64
        %v708 = vpop.permute.xlu0 %707
        %v710 = vmul.f32 %v698, %v708
        %v711 = vmul.f32 %v698, %v699
        %713 = vrot.lane.b32.xlu0 %v711, 64
        %v714 = vpop.permute.xlu0 %713
        %v716 = vadd.f32 %v710, %v714
        %v717 = vtanh.pop %v716
        %v718 = vmul.f32 %v705, %v717
        %s719 = smul.u32 1, 2
        %s720 = smul.addr %s719, 8
        %s721 = scalar_lea.vmem [#allocation2], %s720
        %v722 = vld [vmem:[%s721] sm:$0xff]
        %v723 = vld [vmem:[%s721 + $0x8] sm:$0xff]
        %725 = vrot.lane.b32.xlu0 %v718, 64
        %v726 = vpop.permute.xlu0 %725
        %v727 = vsel %vm440, %v726, 0
        %729 = vmatprep.subr.mxu0 %v595
        %730 = vmatpush1.msra.mxu0 %v594
        %731 = vmatprep.subr.mxu0 %v597
        %732 = vmatpush1.msra.mxu0 %v596
        %733 = vmatprep.subr.mxu0 %v599
        %734 = vmatpush1.msra.mxu0 %v598
        %735 = vmatprep.subr.mxu0 %v601
        %736 = vmatpush1.msra.mxu0 %v600
        %737 = vmatprep.subr.mxu0 %v603
        %738 = vmatpush1.msra.mxu0 %v602
        %739 = vmatprep.subr.mxu0 %v605
        %740 = vmatpush1.msra.mxu0 %v604
        %741 = vmatprep.subr.mxu0 %v607
        %742 = vmatpush1.msra.mxu0 %v606
        %743 = vmatprep.subr.mxu0 %v609
        %744 = vmatpush1.msra.mxu0 %v608
        %745 = vmatprep.subr.mxu0 0.0
        %746 = vmatpush1.msra.mxu0 0.0
        %747 = vmatprep.subr.mxu0 0.0
        %748 = vmatpush1.msra.mxu0 0.0
        %749 = vmatprep.subr.mxu0 0.0
        %750 = vmatpush1.msra.mxu0 0.0
        %751 = vmatprep.subr.mxu0 0.0
        %752 = vmatpush1.msra.mxu0 0.0
        %753 = vmatprep.subr.mxu0 0.0
        %754 = vmatpush1.msra.mxu0 0.0
        %755 = vmatprep.subr.mxu0 0.0
        %756 = vmatpush1.msra.mxu0 0.0
        %757 = vmatprep.subr.mxu0 0.0
        %758 = vmatpush1.msra.mxu0 0.0
        %759 = vmatprep.subr.mxu0 0.0
        %760 = vmatpush1.msra.mxu0 0.0
        %761 = vmatprep.subr.mxu0 0.0
        %762 = vmatpush1.msra.mxu0 0.0
        %763 = vmatprep.subr.mxu0 0.0
        %764 = vmatpush1.msra.mxu0 0.0
        %765 = vmatprep.subr.mxu0 0.0
        %766 = vmatpush1.msra.mxu0 0.0
        %767 = vmatprep.subr.mxu0 0.0
        %768 = vmatpush1.msra.mxu0 0.0
        %769 = vmatprep.subr.mxu0 0.0
        %770 = vmatpush1.msra.mxu0 0.0
        %771 = vmatprep.subr.mxu0 0.0
        %772 = vmatpush1.msra.mxu0 0.0
        %773 = vmatprep.subr.mxu0 0.0
        %774 = vmatpush1.msra.mxu0 0.0
        %775 = vmatprep.subr.mxu0 0.0
        %776 = vmatpush1.msra.mxu0 0.0
        %777 = vmatprep.subr.mxu0 0.0
        %778 = vmatpush1.msra.mxu0 0.0
        %779 = vmatprep.subr.mxu0 0.0
        %780 = vmatpush1.msra.mxu0 0.0
        %781 = vmatprep.subr.mxu0 0.0
        %782 = vmatpush1.msra.mxu0 0.0
        %783 = vmatprep.subr.mxu0 0.0
        %784 = vmatpush1.msra.mxu0 0.0
        %785 = vmatprep.subr.mxu0 0.0
        %786 = vmatpush1.msra.mxu0 0.0
        %787 = vmatprep.subr.mxu0 0.0
        %788 = vmatpush1.msra.mxu0 0.0
        %789 = vmatprep.subr.mxu0 0.0
        %790 = vmatpush1.msra.mxu0 0.0
        %791 = vmatprep.subr.mxu0 0.0
        %792 = vmatpush1.msra.mxu0 0.0
        %793 = vmatprep.mubr.f32.mxu0 0.0
        %794 = vmatmul.mubr.f32.gmra.mrb[0].mxu0 %v727
        %v795 = vpop.f32.mrb[0].mxu0
        %v796 = vadd.f32 0.0, %v795
        %v797 = vpop.f32.mrb[0].mxu0
        %v798 = vadd.f32 0.0, %v797
        %799 = vdwg.mxu0
        %v800 = vadd.f32 %v722, %v796
        %v801 = vadd.f32 %v723, %v798
        %v802 = vxor.u32 %v800, 2147483648
        %v803 = vmul.f32 %v802, 1.442695
        %v804 = vpow.pop %v803
        %v805 = vadd.f32 %v804, 1.0
        %v806 = vrcp.pop %v805
        %v807 = vmul.f32 1.0, %v806
        %v808 = vtanh.pop %v801
        %v809 = vxor.u32 %v801, 2147483648
        %v810 = vmul.f32 %v809, 1.442695
        %v811 = vpow.pop %v810
        %v812 = vadd.f32 %v811, 1.0
        %v813 = vrcp.pop %v812
        %v814 = vmul.f32 1.0, %v813
        %v815 = vmul.f32 %v807, %v716
        %v816 = vmul.f32 %v807, %v808
        %818 = vrot.lane.b32.xlu0 %v816, 64
        %v819 = vpop.permute.xlu0 %818
        %v821 = vadd.f32 %v815, %v819
        %v822 = vtanh.pop %v821
        %v823 = vmul.f32 %v814, %v822
        %s824 = smul.u32 2, 2
        %s825 = smul.addr %s824, 8
        %s826 = scalar_lea.vmem [#allocation2], %s825
        %v827 = vld [vmem:[%s826] sm:$0xff]
        %v828 = vld [vmem:[%s826 + $0x8] sm:$0xff]
        %830 = vrot.lane.b32.xlu0 %v823, 64
        %v831 = vpop.permute.xlu0 %830
        %v832 = vsel %vm440, %v831, 0
        %834 = vmatprep.subr.mxu0 %v595
        %835 = vmatpush1.msra.mxu0 %v594
        %836 = vmatprep.subr.mxu0 %v597
        %837 = vmatpush1.msra.mxu0 %v596
        %838 = vmatprep.subr.mxu0 %v599
        %839 = vmatpush1.msra.mxu0 %v598
        %840 = vmatprep.subr.mxu0 %v601
        %841 = vmatpush1.msra.mxu0 %v600
        %842 = vmatprep.subr.mxu0 %v603
        %843 = vmatpush1.msra.mxu0 %v602
        %844 = vmatprep.subr.mxu0 %v605
        %845 = vmatpush1.msra.mxu0 %v604
        %846 = vmatprep.subr.mxu0 %v607
        %847 = vmatpush1.msra.mxu0 %v606
        %848 = vmatprep.subr.mxu0 %v609
        %849 = vmatpush1.msra.mxu0 %v608
        %850 = vmatprep.subr.mxu0 0.0
        %851 = vmatpush1.msra.mxu0 0.0
        %852 = vmatprep.subr.mxu0 0.0
        %853 = vmatpush1.msra.mxu0 0.0
        %854 = vmatprep.subr.mxu0 0.0
        %855 = vmatpush1.msra.mxu0 0.0
        %856 = vmatprep.subr.mxu0 0.0
        %857 = vmatpush1.msra.mxu0 0.0
        %858 = vmatprep.subr.mxu0 0.0
        %859 = vmatpush1.msra.mxu0 0.0
        %860 = vmatprep.subr.mxu0 0.0
        %861 = vmatpush1.msra.mxu0 0.0
        %862 = vmatprep.subr.mxu0 0.0
        %863 = vmatpush1.msra.mxu0 0.0
        %864 = vmatprep.subr.mxu0 0.0
        %865 = vmatpush1.msra.mxu0 0.0
        %866 = vmatprep.subr.mxu0 0.0
        %867 = vmatpush1.msra.mxu0 0.0
        %868 = vmatprep.subr.mxu0 0.0
        %869 = vmatpush1.msra.mxu0 0.0
        %870 = vmatprep.subr.mxu0 0.0
        %871 = vmatpush1.msra.mxu0 0.0
        %872 = vmatprep.subr.mxu0 0.0
        %873 = vmatpush1.msra.mxu0 0.0
        %874 = vmatprep.subr.mxu0 0.0
        %875 = vmatpush1.msra.mxu0 0.0
        %876 = vmatprep.subr.mxu0 0.0
        %877 = vmatpush1.msra.mxu0 0.0
        %878 = vmatprep.subr.mxu0 0.0
        %879 = vmatpush1.msra.mxu0 0.0
        %880 = vmatprep.subr.mxu0 0.0
        %881 = vmatpush1.msra.mxu0 0.0
        %882 = vmatprep.subr.mxu0 0.0
        %883 = vmatpush1.msra.mxu0 0.0
        %884 = vmatprep.subr.mxu0 0.0
        %885 = vmatpush1.msra.mxu0 0.0
        %886 = vmatprep.subr.mxu0 0.0
        %887 = vmatpush1.msra.mxu0 0.0
        %888 = vmatprep.subr.mxu0 0.0
        %889 = vmatpush1.msra.mxu0 0.0
        %890 = vmatprep.subr.mxu0 0.0
        %891 = vmatpush1.msra.mxu0 0.0
        %892 = vmatprep.subr.mxu0 0.0
        %893 = vmatpush1.msra.mxu0 0.0
        %894 = vmatprep.subr.mxu0 0.0
        %895 = vmatpush1.msra.mxu0 0.0
        %896 = vmatprep.subr.mxu0 0.0
        %897 = vmatpush1.msra.mxu0 0.0
        %898 = vmatprep.mubr.f32.mxu0 0.0
        %899 = vmatmul.mubr.f32.gmra.mrb[0].mxu0 %v832
        %v900 = vpop.f32.mrb[0].mxu0
        %v901 = vadd.f32 0.0, %v900
        %v902 = vpop.f32.mrb[0].mxu0
        %v903 = vadd.f32 0.0, %v902
        %904 = vdwg.mxu0
        %v905 = vadd.f32 %v827, %v901
        %v906 = vadd.f32 %v828, %v903
        %v907 = vxor.u32 %v905, 2147483648
        %v908 = vmul.f32 %v907, 1.442695
        %v909 = vpow.pop %v908
        %v910 = vadd.f32 %v909, 1.0
        %v911 = vrcp.pop %v910
        %v912 = vmul.f32 1.0, %v911
        %v913 = vtanh.pop %v906
        %v914 = vxor.u32 %v906, 2147483648
        %v915 = vmul.f32 %v914, 1.442695
        %v916 = vpow.pop %v915
        %v917 = vadd.f32 %v916, 1.0
        %v918 = vrcp.pop %v917
        %v919 = vmul.f32 1.0, %v918
        %v920 = vmul.f32 %v912, %v821
        %v921 = vmul.f32 %v912, %v913
        %923 = vrot.lane.b32.xlu0 %v921, 64
        %v924 = vpop.permute.xlu0 %923
        %v926 = vadd.f32 %v920, %v924
        %v927 = vtanh.pop %v926
        %v928 = vmul.f32 %v919, %v927
        %s929 = smul.u32 3, 2
        %s930 = smul.addr %s929, 8
        %s931 = scalar_lea.vmem [#allocation2], %s930
        %v932 = vld [vmem:[%s931] sm:$0xff]
        %v933 = vld [vmem:[%s931 + $0x8] sm:$0xff]
        %935 = vrot.lane.b32.xlu0 %v928, 64
        %v936 = vpop.permute.xlu0 %935
        %v937 = vsel %vm440, %v936, 0
        %939 = vmatprep.subr.mxu0 %v595
        %940 = vmatpush1.msra.mxu0 %v594
        %941 = vmatprep.subr.mxu0 %v597
        %942 = vmatpush1.msra.mxu0 %v596
        %943 = vmatprep.subr.mxu0 %v599
        %944 = vmatpush1.msra.mxu0 %v598
        %945 = vmatprep.subr.mxu0 %v601
        %946 = vmatpush1.msra.mxu0 %v600
        %947 = vmatprep.subr.mxu0 %v603
        %948 = vmatpush1.msra.mxu0 %v602
        %949 = vmatprep.subr.mxu0 %v605
        %950 = vmatpush1.msra.mxu0 %v604
        %951 = vmatprep.subr.mxu0 %v607
        %952 = vmatpush1.msra.mxu0 %v606
        %953 = vmatprep.subr.mxu0 %v609
        %954 = vmatpush1.msra.mxu0 %v608
        %955 = vmatprep.subr.mxu0 0.0
        %956 = vmatpush1.msra.mxu0 0.0
        %957 = vmatprep.subr.mxu0 0.0
        %958 = vmatpush1.msra.mxu0 0.0
        %959 = vmatprep.subr.mxu0 0.0
        %960 = vmatpush1.msra.mxu0 0.0
        %961 = vmatprep.subr.mxu0 0.0
        %962 = vmatpush1.msra.mxu0 0.0
        %963 = vmatprep.subr.mxu0 0.0
        %964 = vmatpush1.msra.mxu0 0.0
        %965 = vmatprep.subr.mxu0 0.0
        %966 = vmatpush1.msra.mxu0 0.0
        %967 = vmatprep.subr.mxu0 0.0
        %968 = vmatpush1.msra.mxu0 0.0
        %969 = vmatprep.subr.mxu0 0.0
        %970 = vmatpush1.msra.mxu0 0.0
        %971 = vmatprep.subr.mxu0 0.0
        %972 = vmatpush1.msra.mxu0 0.0
        %973 = vmatprep.subr.mxu0 0.0
        %974 = vmatpush1.msra.mxu0 0.0
        %975 = vmatprep.subr.mxu0 0.0
        %976 = vmatpush1.msra.mxu0 0.0
        %977 = vmatprep.subr.mxu0 0.0
        %978 = vmatpush1.msra.mxu0 0.0
        %979 = vmatprep.subr.mxu0 0.0
        %980 = vmatpush1.msra.mxu0 0.0
        %981 = vmatprep.subr.mxu0 0.0
        %982 = vmatpush1.msra.mxu0 0.0
        %983 = vmatprep.subr.mxu0 0.0
        %984 = vmatpush1.msra.mxu0 0.0
        %985 = vmatprep.subr.mxu0 0.0
        %986 = vmatpush1.msra.mxu0 0.0
        %987 = vmatprep.subr.mxu0 0.0
        %988 = vmatpush1.msra.mxu0 0.0
        %989 = vmatprep.subr.mxu0 0.0
        %990 = vmatpush1.msra.mxu0 0.0
        %991 = vmatprep.subr.mxu0 0.0
        %992 = vmatpush1.msra.mxu0 0.0
        %993 = vmatprep.subr.mxu0 0.0
        %994 = vmatpush1.msra.mxu0 0.0
        %995 = vmatprep.subr.mxu0 0.0
        %996 = vmatpush1.msra.mxu0 0.0
        %997 = vmatprep.subr.mxu0 0.0
        %998 = vmatpush1.msra.mxu0 0.0
        %999 = vmatprep.subr.mxu0 0.0
        %1000 = vmatpush1.msra.mxu0 0.0
        %1001 = vmatprep.subr.mxu0 0.0
        %1002 = vmatpush1.msra.mxu0 0.0
        %1003 = vmatprep.mubr.f32.mxu0 0.0
        %1004 = vmatmul.mubr.f32.gmra.mrb[0].mxu0 %v937
        %v1005 = vpop.f32.mrb[0].mxu0
        %v1006 = vadd.f32 0.0, %v1005
        %v1007 = vpop.f32.mrb[0].mxu0
        %v1008 = vadd.f32 0.0, %v1007
        %1009 = vdwg.mxu0
        %v1010 = vadd.f32 %v932, %v1006
        %v1011 = vadd.f32 %v933, %v1008
        %v1012 = vxor.u32 %v1010, 2147483648
        %v1013 = vmul.f32 %v1012, 1.442695
        %v1014 = vpow.pop %v1013
        %v1015 = vadd.f32 %v1014, 1.0
        %v1016 = vrcp.pop %v1015
        %v1017 = vmul.f32 1.0, %v1016
        %v1018 = vtanh.pop %v1011
        %v1019 = vxor.u32 %v1011, 2147483648
        %v1020 = vmul.f32 %v1019, 1.442695
        %v1021 = vpow.pop %v1020
        %v1022 = vadd.f32 %v1021, 1.0
        %v1023 = vrcp.pop %v1022
        %v1024 = vmul.f32 1.0, %v1023
        %v1025 = vmul.f32 %v1017, %v926
        %v1026 = vmul.f32 %v1017, %v1018
        %1028 = vrot.lane.b32.xlu0 %v1026, 64
        %v1029 = vpop.permute.xlu0 %1028
        %v1031 = vadd.f32 %v1025, %v1029
        %v1032 = vtanh.pop %v1031
        %v1033 = vmul.f32 %v1024, %v1032
        %s1034 = smul.u32 4, 2
        %s1035 = smul.addr %s1034, 8
        %s1036 = scalar_lea.vmem [#allocation2], %s1035
        %v1037 = vld [vmem:[%s1036] sm:$0xff]
        %v1038 = vld [vmem:[%s1036 + $0x8] sm:$0xff]
        %1040 = vrot.lane.b32.xlu0 %v1033, 64
        %v1041 = vpop.permute.xlu0 %1040
        %v1042 = vsel %vm440, %v1041, 0
        %1044 = vmatprep.subr.mxu0 %v595
        %1045 = vmatpush1.msra.mxu0 %v594
        %1046 = vmatprep.subr.mxu0 %v597
        %1047 = vmatpush1.msra.mxu0 %v596
        %1048 = vmatprep.subr.mxu0 %v599
        %1049 = vmatpush1.msra.mxu0 %v598
        %1050 = vmatprep.subr.mxu0 %v601
        %1051 = vmatpush1.msra.mxu0 %v600
        %1052 = vmatprep.subr.mxu0 %v603
        %1053 = vmatpush1.msra.mxu0 %v602
        %1054 = vmatprep.subr.mxu0 %v605
        %1055 = vmatpush1.msra.mxu0 %v604
        %1056 = vmatprep.subr.mxu0 %v607
        %1057 = vmatpush1.msra.mxu0 %v606
        %1058 = vmatprep.subr.mxu0 %v609
        %1059 = vmatpush1.msra.mxu0 %v608
        %1060 = vmatprep.subr.mxu0 0.0
        %1061 = vmatpush1.msra.mxu0 0.0
        %1062 = vmatprep.subr.mxu0 0.0
        %1063 = vmatpush1.msra.mxu0 0.0
        %1064 = vmatprep.subr.mxu0 0.0
        %1065 = vmatpush1.msra.mxu0 0.0
        %1066 = vmatprep.subr.mxu0 0.0
        %1067 = vmatpush1.msra.mxu0 0.0
        %1068 = vmatprep.subr.mxu0 0.0
        %1069 = vmatpush1.msra.mxu0 0.0
        %1070 = vmatprep.subr.mxu0 0.0
        %1071 = vmatpush1.msra.mxu0 0.0
        %1072 = vmatprep.subr.mxu0 0.0
        %1073 = vmatpush1.msra.mxu0 0.0
        %1074 = vmatprep.subr.mxu0 0.0
        %1075 = vmatpush1.msra.mxu0 0.0
        %1076 = vmatprep.subr.mxu0 0.0
        %1077 = vmatpush1.msra.mxu0 0.0
        %1078 = vmatprep.subr.mxu0 0.0
        %1079 = vmatpush1.msra.mxu0 0.0
        %1080 = vmatprep.subr.mxu0 0.0
        %1081 = vmatpush1.msra.mxu0 0.0
        %1082 = vmatprep.subr.mxu0 0.0
        %1083 = vmatpush1.msra.mxu0 0.0
        %1084 = vmatprep.subr.mxu0 0.0
        %1085 = vmatpush1.msra.mxu0 0.0
        %1086 = vmatprep.subr.mxu0 0.0
        %1087 = vmatpush1.msra.mxu0 0.0
        %1088 = vmatprep.subr.mxu0 0.0
        %1089 = vmatpush1.msra.mxu0 0.0
        %1090 = vmatprep.subr.mxu0 0.0
        %1091 = vmatpush1.msra.mxu0 0.0
        %1092 = vmatprep.subr.mxu0 0.0
        %1093 = vmatpush1.msra.mxu0 0.0
        %1094 = vmatprep.subr.mxu0 0.0
        %1095 = vmatpush1.msra.mxu0 0.0
        %1096 = vmatprep.subr.mxu0 0.0
        %1097 = vmatpush1.msra.mxu0 0.0
        %1098 = vmatprep.subr.mxu0 0.0
        %1099 = vmatpush1.msra.mxu0 0.0
        %1100 = vmatprep.subr.mxu0 0.0
        %1101 = vmatpush1.msra.mxu0 0.0
        %1102 = vmatprep.subr.mxu0 0.0
        %1103 = vmatpush1.msra.mxu0 0.0
        %1104 = vmatprep.subr.mxu0 0.0
        %1105 = vmatpush1.msra.mxu0 0.0
        %1106 = vmatprep.subr.mxu0 0.0
        %1107 = vmatpush1.msra.mxu0 0.0
        %1108 = vmatprep.mubr.f32.mxu0 0.0
        %1109 = vmatmul.mubr.f32.gmra.mrb[0].mxu0 %v1042
        %v1110 = vpop.f32.mrb[0].mxu0
        %v1111 = vadd.f32 0.0, %v1110
        %v1112 = vpop.f32.mrb[0].mxu0
        %v1113 = vadd.f32 0.0, %v1112
        %1114 = vdwg.mxu0
        %v1115 = vadd.f32 %v1037, %v1111
        %v1116 = vadd.f32 %v1038, %v1113
        %v1117 = vxor.u32 %v1115, 2147483648
        %v1118 = vmul.f32 %v1117, 1.442695
        %v1119 = vpow.pop %v1118
        %v1120 = vadd.f32 %v1119, 1.0
        %v1121 = vrcp.pop %v1120
        %v1122 = vmul.f32 1.0, %v1121
        %v1123 = vtanh.pop %v1116
        %v1124 = vxor.u32 %v1116, 2147483648
        %v1125 = vmul.f32 %v1124, 1.442695
        %v1126 = vpow.pop %v1125
        %v1127 = vadd.f32 %v1126, 1.0
        %v1128 = vrcp.pop %v1127
        %v1129 = vmul.f32 1.0, %v1128
        %v1130 = vmul.f32 %v1122, %v1031
        %v1131 = vmul.f32 %v1122, %v1123
        %1133 = vrot.lane.b32.xlu0 %v1131, 64
        %v1134 = vpop.permute.xlu0 %1133
        %v1136 = vadd.f32 %v1130, %v1134
        %v1137 = vtanh.pop %v1136
        %v1138 = vmul.f32 %v1129, %v1137
        %s1139 = smul.u32 5, 2
        %s1140 = smul.addr %s1139, 8
        %s1141 = scalar_lea.vmem [#allocation2], %s1140
        %v1142 = vld [vmem:[%s1141] sm:$0xff]
        %v1143 = vld [vmem:[%s1141 + $0x8] sm:$0xff]
        %1145 = vrot.lane.b32.xlu0 %v1138, 64
        %v1146 = vpop.permute.xlu0 %1145
        %v1147 = vsel %vm440, %v1146, 0
        %1149 = vmatprep.subr.mxu0 %v595
        %1150 = vmatpush1.msra.mxu0 %v594
        %1151 = vmatprep.subr.mxu0 %v597
        %1152 = vmatpush1.msra.mxu0 %v596
        %1153 = vmatprep.subr.mxu0 %v599
        %1154 = vmatpush1.msra.mxu0 %v598
        %1155 = vmatprep.subr.mxu0 %v601
        %1156 = vmatpush1.msra.mxu0 %v600
        %1157 = vmatprep.subr.mxu0 %v603
        %1158 = vmatpush1.msra.mxu0 %v602
        %1159 = vmatprep.subr.mxu0 %v605
        %1160 = vmatpush1.msra.mxu0 %v604
        %1161 = vmatprep.subr.mxu0 %v607
        %1162 = vmatpush1.msra.mxu0 %v606
        %1163 = vmatprep.subr.mxu0 %v609
        %1164 = vmatpush1.msra.mxu0 %v608
        %1165 = vmatprep.subr.mxu0 0.0
        %1166 = vmatpush1.msra.mxu0 0.0
        %1167 = vmatprep.subr.mxu0 0.0
        %1168 = vmatpush1.msra.mxu0 0.0
        %1169 = vmatprep.subr.mxu0 0.0
        %1170 = vmatpush1.msra.mxu0 0.0
        %1171 = vmatprep.subr.mxu0 0.0
        %1172 = vmatpush1.msra.mxu0 0.0
        %1173 = vmatprep.subr.mxu0 0.0
        %1174 = vmatpush1.msra.mxu0 0.0
        %1175 = vmatprep.subr.mxu0 0.0
        %1176 = vmatpush1.msra.mxu0 0.0
        %1177 = vmatprep.subr.mxu0 0.0
        %1178 = vmatpush1.msra.mxu0 0.0
        %1179 = vmatprep.subr.mxu0 0.0
        %1180 = vmatpush1.msra.mxu0 0.0
        %1181 = vmatprep.subr.mxu0 0.0
        %1182 = vmatpush1.msra.mxu0 0.0
        %1183 = vmatprep.subr.mxu0 0.0
        %1184 = vmatpush1.msra.mxu0 0.0
        %1185 = vmatprep.subr.mxu0 0.0
        %1186 = vmatpush1.msra.mxu0 0.0
        %1187 = vmatprep.subr.mxu0 0.0
        %1188 = vmatpush1.msra.mxu0 0.0
        %1189 = vmatprep.subr.mxu0 0.0
        %1190 = vmatpush1.msra.mxu0 0.0
        %1191 = vmatprep.subr.mxu0 0.0
        %1192 = vmatpush1.msra.mxu0 0.0
        %1193 = vmatprep.subr.mxu0 0.0
        %1194 = vmatpush1.msra.mxu0 0.0
        %1195 = vmatprep.subr.mxu0 0.0
        %1196 = vmatpush1.msra.mxu0 0.0
        %1197 = vmatprep.subr.mxu0 0.0
        %1198 = vmatpush1.msra.mxu0 0.0
        %1199 = vmatprep.subr.mxu0 0.0
        %1200 = vmatpush1.msra.mxu0 0.0
        %1201 = vmatprep.subr.mxu0 0.0
        %1202 = vmatpush1.msra.mxu0 0.0
        %1203 = vmatprep.subr.mxu0 0.0
        %1204 = vmatpush1.msra.mxu0 0.0
        %1205 = vmatprep.subr.mxu0 0.0
        %1206 = vmatpush1.msra.mxu0 0.0
        %1207 = vmatprep.subr.mxu0 0.0
        %1208 = vmatpush1.msra.mxu0 0.0
        %1209 = vmatprep.subr.mxu0 0.0
        %1210 = vmatpush1.msra.mxu0 0.0
        %1211 = vmatprep.subr.mxu0 0.0
        %1212 = vmatpush1.msra.mxu0 0.0
        %1213 = vmatprep.mubr.f32.mxu0 0.0
        %1214 = vmatmul.mubr.f32.gmra.mrb[0].mxu0 %v1147
        %v1215 = vpop.f32.mrb[0].mxu0
        %v1216 = vadd.f32 0.0, %v1215
        %v1217 = vpop.f32.mrb[0].mxu0
        %v1218 = vadd.f32 0.0, %v1217
        %1219 = vdwg.mxu0
        %v1220 = vadd.f32 %v1142, %v1216
        %v1221 = vadd.f32 %v1143, %v1218
        %v1222 = vxor.u32 %v1220, 2147483648
        %v1223 = vmul.f32 %v1222, 1.442695
        %v1224 = vpow.pop %v1223
        %v1225 = vadd.f32 %v1224, 1.0
        %v1226 = vrcp.pop %v1225
        %v1227 = vmul.f32 1.0, %v1226
        %v1228 = vtanh.pop %v1221
        %v1229 = vxor.u32 %v1221, 2147483648
        %v1230 = vmul.f32 %v1229, 1.442695
        %v1231 = vpow.pop %v1230
        %v1232 = vadd.f32 %v1231, 1.0
        %v1233 = vrcp.pop %v1232
        %v1234 = vmul.f32 1.0, %v1233
        %v1235 = vmul.f32 %v1227, %v1136
        %v1236 = vmul.f32 %v1227, %v1228
        %1238 = vrot.lane.b32.xlu0 %v1236, 64
        %v1239 = vpop.permute.xlu0 %1238
        %v1241 = vadd.f32 %v1235, %v1239
        %v1242 = vtanh.pop %v1241
        %v1243 = vmul.f32 %v1234, %v1242
        %s1244 = smul.u32 6, 2
        %s1245 = smul.addr %s1244, 8
        %s1246 = scalar_lea.vmem [#allocation2], %s1245
        %v1247 = vld [vmem:[%s1246] sm:$0xff]
        %v1248 = vld [vmem:[%s1246 + $0x8] sm:$0xff]
        %1250 = vrot.lane.b32.xlu0 %v1243, 64
        %v1251 = vpop.permute.xlu0 %1250
        %v1252 = vsel %vm440, %v1251, 0
        %1254 = vmatprep.subr.mxu0 %v595
        %1255 = vmatpush1.msra.mxu0 %v594
        %1256 = vmatprep.subr.mxu0 %v597
        %1257 = vmatpush1.msra.mxu0 %v596
        %1258 = vmatprep.subr.mxu0 %v599
        %1259 = vmatpush1.msra.mxu0 %v598
        %1260 = vmatprep.subr.mxu0 %v601
        %1261 = vmatpush1.msra.mxu0 %v600
        %1262 = vmatprep.subr.mxu0 %v603
        %1263 = vmatpush1.msra.mxu0 %v602
        %1264 = vmatprep.subr.mxu0 %v605
        %1265 = vmatpush1.msra.mxu0 %v604
        %1266 = vmatprep.subr.mxu0 %v607
        %1267 = vmatpush1.msra.mxu0 %v606
        %1268 = vmatprep.subr.mxu0 %v609
        %1269 = vmatpush1.msra.mxu0 %v608
        %1270 = vmatprep.subr.mxu0 0.0
        %1271 = vmatpush1.msra.mxu0 0.0
        %1272 = vmatprep.subr.mxu0 0.0
        %1273 = vmatpush1.msra.mxu0 0.0
        %1274 = vmatprep.subr.mxu0 0.0
        %1275 = vmatpush1.msra.mxu0 0.0
        %1276 = vmatprep.subr.mxu0 0.0
        %1277 = vmatpush1.msra.mxu0 0.0
        %1278 = vmatprep.subr.mxu0 0.0
        %1279 = vmatpush1.msra.mxu0 0.0
        %1280 = vmatprep.subr.mxu0 0.0
        %1281 = vmatpush1.msra.mxu0 0.0
        %1282 = vmatprep.subr.mxu0 0.0
        %1283 = vmatpush1.msra.mxu0 0.0
        %1284 = vmatprep.subr.mxu0 0.0
        %1285 = vmatpush1.msra.mxu0 0.0
        %1286 = vmatprep.subr.mxu0 0.0
        %1287 = vmatpush1.msra.mxu0 0.0
        %1288 = vmatprep.subr.mxu0 0.0
        %1289 = vmatpush1.msra.mxu0 0.0
        %1290 = vmatprep.subr.mxu0 0.0
        %1291 = vmatpush1.msra.mxu0 0.0
        %1292 = vmatprep.subr.mxu0 0.0
        %1293 = vmatpush1.msra.mxu0 0.0
        %1294 = vmatprep.subr.mxu0 0.0
        %1295 = vmatpush1.msra.mxu0 0.0
        %1296 = vmatprep.subr.mxu0 0.0
        %1297 = vmatpush1.msra.mxu0 0.0
        %1298 = vmatprep.subr.mxu0 0.0
        %1299 = vmatpush1.msra.mxu0 0.0
        %1300 = vmatprep.subr.mxu0 0.0
        %1301 = vmatpush1.msra.mxu0 0.0
        %1302 = vmatprep.subr.mxu0 0.0
        %1303 = vmatpush1.msra.mxu0 0.0
        %1304 = vmatprep.subr.mxu0 0.0
        %1305 = vmatpush1.msra.mxu0 0.0
        %1306 = vmatprep.subr.mxu0 0.0
        %1307 = vmatpush1.msra.mxu0 0.0
        %1308 = vmatprep.subr.mxu0 0.0
        %1309 = vmatpush1.msra.mxu0 0.0
        %1310 = vmatprep.subr.mxu0 0.0
        %1311 = vmatpush1.msra.mxu0 0.0
        %1312 = vmatprep.subr.mxu0 0.0
        %1313 = vmatpush1.msra.mxu0 0.0
        %1314 = vmatprep.subr.mxu0 0.0
        %1315 = vmatpush1.msra.mxu0 0.0
        %1316 = vmatprep.subr.mxu0 0.0
        %1317 = vmatpush1.msra.mxu0 0.0
        %1318 = vmatprep.mubr.f32.mxu0 0.0
        %1319 = vmatmul.mubr.f32.gmra.mrb[0].mxu0 %v1252
        %v1320 = vpop.f32.mrb[0].mxu0
        %v1321 = vadd.f32 0.0, %v1320
        %v1322 = vpop.f32.mrb[0].mxu0
        %v1323 = vadd.f32 0.0, %v1322
        %1324 = vdwg.mxu0
        %v1325 = vadd.f32 %v1247, %v1321
        %v1326 = vadd.f32 %v1248, %v1323
        %v1327 = vxor.u32 %v1325, 2147483648
        %v1328 = vmul.f32 %v1327, 1.442695
        %v1329 = vpow.pop %v1328
        %v1330 = vadd.f32 %v1329, 1.0
        %v1331 = vrcp.pop %v1330
        %v1332 = vmul.f32 1.0, %v1331
        %v1333 = vtanh.pop %v1326
        %v1334 = vxor.u32 %v1326, 2147483648
        %v1335 = vmul.f32 %v1334, 1.442695
        %v1336 = vpow.pop %v1335
        %v1337 = vadd.f32 %v1336, 1.0
        %v1338 = vrcp.pop %v1337
        %v1339 = vmul.f32 1.0, %v1338
        %v1340 = vmul.f32 %v1332, %v1241
        %v1341 = vmul.f32 %v1332, %v1333
        %1343 = vrot.lane.b32.xlu0 %v1341, 64
        %v1344 = vpop.permute.xlu0 %1343
        %v1346 = vadd.f32 %v1340, %v1344
        %v1347 = vtanh.pop %v1346
        %v1348 = vmul.f32 %v1339, %v1347
        %s1349 = smul.u32 7, 2
        %s1350 = smul.addr %s1349, 8
        %s1351 = scalar_lea.vmem [#allocation2], %s1350
        %v1352 = vld [vmem:[%s1351] sm:$0xff]
        %v1353 = vld [vmem:[%s1351 + $0x8] sm:$0xff]
        %1355 = vrot.lane.b32.xlu0 %v1348, 64
        %v1356 = vpop.permute.xlu0 %1355
        %v1357 = vsel %vm440, %v1356, 0
        %1359 = vmatprep.subr.mxu0 %v595
        %1360 = vmatpush1.msra.mxu0 %v594
        %1361 = vmatprep.subr.mxu0 %v597
        %1362 = vmatpush1.msra.mxu0 %v596
        %1363 = vmatprep.subr.mxu0 %v599
        %1364 = vmatpush1.msra.mxu0 %v598
        %1365 = vmatprep.subr.mxu0 %v601
        %1366 = vmatpush1.msra.mxu0 %v600
        %1367 = vmatprep.subr.mxu0 %v603
        %1368 = vmatpush1.msra.mxu0 %v602
        %1369 = vmatprep.subr.mxu0 %v605
        %1370 = vmatpush1.msra.mxu0 %v604
        %1371 = vmatprep.subr.mxu0 %v607
        %1372 = vmatpush1.msra.mxu0 %v606
        %1373 = vmatprep.subr.mxu0 %v609
        %1374 = vmatpush1.msra.mxu0 %v608
        %1375 = vmatprep.subr.mxu0 0.0
        %1376 = vmatpush1.msra.mxu0 0.0
        %1377 = vmatprep.subr.mxu0 0.0
        %1378 = vmatpush1.msra.mxu0 0.0
        %1379 = vmatprep.subr.mxu0 0.0
        %1380 = vmatpush1.msra.mxu0 0.0
        %1381 = vmatprep.subr.mxu0 0.0
        %1382 = vmatpush1.msra.mxu0 0.0
        %1383 = vmatprep.subr.mxu0 0.0
        %1384 = vmatpush1.msra.mxu0 0.0
        %1385 = vmatprep.subr.mxu0 0.0
        %1386 = vmatpush1.msra.mxu0 0.0
        %1387 = vmatprep.subr.mxu0 0.0
        %1388 = vmatpush1.msra.mxu0 0.0
        %1389 = vmatprep.subr.mxu0 0.0
        %1390 = vmatpush1.msra.mxu0 0.0
        %1391 = vmatprep.subr.mxu0 0.0
        %1392 = vmatpush1.msra.mxu0 0.0
        %1393 = vmatprep.subr.mxu0 0.0
        %1394 = vmatpush1.msra.mxu0 0.0
        %1395 = vmatprep.subr.mxu0 0.0
        %1396 = vmatpush1.msra.mxu0 0.0
        %1397 = vmatprep.subr.mxu0 0.0
        %1398 = vmatpush1.msra.mxu0 0.0
        %1399 = vmatprep.subr.mxu0 0.0
        %1400 = vmatpush1.msra.mxu0 0.0
        %1401 = vmatprep.subr.mxu0 0.0
        %1402 = vmatpush1.msra.mxu0 0.0
        %1403 = vmatprep.subr.mxu0 0.0
        %1404 = vmatpush1.msra.mxu0 0.0
        %1405 = vmatprep.subr.mxu0 0.0
        %1406 = vmatpush1.msra.mxu0 0.0
        %1407 = vmatprep.subr.mxu0 0.0
        %1408 = vmatpush1.msra.mxu0 0.0
        %1409 = vmatprep.subr.mxu0 0.0
        %1410 = vmatpush1.msra.mxu0 0.0
        %1411 = vmatprep.subr.mxu0 0.0
        %1412 = vmatpush1.msra.mxu0 0.0
        %1413 = vmatprep.subr.mxu0 0.0
        %1414 = vmatpush1.msra.mxu0 0.0
        %1415 = vmatprep.subr.mxu0 0.0
        %1416 = vmatpush1.msra.mxu0 0.0
        %1417 = vmatprep.subr.mxu0 0.0
        %1418 = vmatpush1.msra.mxu0 0.0
        %1419 = vmatprep.subr.mxu0 0.0
        %1420 = vmatpush1.msra.mxu0 0.0
        %1421 = vmatprep.subr.mxu0 0.0
        %1422 = vmatpush1.msra.mxu0 0.0
        %1423 = vmatprep.mubr.f32.mxu0 0.0
        %1424 = vmatmul.mubr.f32.gmra.mrb[0].mxu0 %v1357
        %v1425 = vpop.f32.mrb[0].mxu0
        %v1426 = vadd.f32 0.0, %v1425
        %v1427 = vpop.f32.mrb[0].mxu0
        %v1428 = vadd.f32 0.0, %v1427
        %1429 = vdwg.mxu0
        %v1430 = vadd.f32 %v1352, %v1426
        %v1431 = vadd.f32 %v1353, %v1428
        %v1432 = vxor.u32 %v1430, 2147483648
        %v1433 = vmul.f32 %v1432, 1.442695
        %v1434 = vpow.pop %v1433
        %v1435 = vadd.f32 %v1434, 1.0
        %v1436 = vrcp.pop %v1435
        %v1437 = vmul.f32 1.0, %v1436
        %v1438 = vtanh.pop %v1431
        %v1439 = vxor.u32 %v1431, 2147483648
        %v1440 = vmul.f32 %v1439, 1.442695
        %v1441 = vpow.pop %v1440
        %v1442 = vadd.f32 %v1441, 1.0
        %v1443 = vrcp.pop %v1442
        %v1444 = vmul.f32 1.0, %v1443
        %v1445 = vmul.f32 %v1437, %v1346
        %v1446 = vmul.f32 %v1437, %v1438
        %1448 = vrot.lane.b32.xlu0 %v1446, 64
        %v1449 = vpop.permute.xlu0 %1448
        %v1451 = vadd.f32 %v1445, %v1449
        %v1452 = vtanh.pop %v1451
        %v1453 = vmul.f32 %v1444, %v1452
        %1455 = vrot.lane.b32.xlu0 %v1453, 64
        %v1456 = vpop.permute.xlu0 %1455
        %1458 = vst.msk [vmem:[#allocation3] sm:$0xff] %vm440, %v1456
        %1460 = vrot.lane.b32.xlu0 %v1451, 64
        %v1461 = vpop.permute.xlu0 %1460
        %1463 = vst.msk [vmem:[#allocation4] sm:$0xff] %vm440, %v1461
        %p1464 = scmp.eq.s32.totalorder %s18, 1
        // Predicated region
        $region49: #{tpu_custom_call.1} parent=43 // pred_check
          %p1465 = pneg %p1464
        $region50: #{tpu_custom_call.1} parent=43 // pred_check_branch
          %1467 = sbr.rel (%p1465) target = $region52
        $region51: #{tpu_custom_call.1} parent=43 // pred_region
          %1468 = vst.msk [vmem:[#allocation5] sm:$0xff] %vm440, %v1456
          %vm1469 = vcmask 1048064
          %1470 = vst.msk [vmem:[#allocation5] sm:$0xff] %vm1469, %v1451
        $region52: #{tpu_custom_call.1} parent=43 // pred_fallthru
          _
        // Predicated region
        $region53: #{tpu_custom_call.1} parent=43 // pred_check
          %p1471 = pneg %p162
        $region54: #{tpu_custom_call.1} parent=43 // pred_check_branch
          %1473 = sbr.rel (%p1471) target = $region56
        $region55: #{tpu_custom_call.1} parent=43 // pred_region
          %s1475 = ssub.s32 128, 128
          %1476 = vsyncadd [#allocation6], %s1475
          %s1478 = sshll.u32 [#allocation5], 4
          %s1479 = int_to_ptr.vmem [resolvable:$true] %s1478
          %1481 = dma.vmem_to_hbm [thread:$0]  %s1479, 128, %s6, [#allocation6]
        $region56: #{tpu_custom_call.1} parent=43 // pred_fallthru
          _
        // Predicated region
        $region57: #{tpu_custom_call.1} parent=43 // pred_check
          %p1482 = pneg %p162
        $region58: #{tpu_custom_call.1} parent=43 // pred_check_branch
          %1484 = sbr.rel (%p1482) target = $region60
        $region59: #{tpu_custom_call.1} parent=43 // pred_region
          %1485 = dma.done [#allocation6], 128
        $region60: #{tpu_custom_call.1} parent=43 // pred_fallthru
          _
      $region44: #{tpu_custom_call.1} parent=5 // pred_fallthru
        _
      %p1486 = scmp.le.s32.totalorder 2, %s13
      // Predicated region
      $region61: #{tpu_custom_call.1} parent=5 // pred_check
        %p1487 = pneg %p1486
      $region62: #{tpu_custom_call.1} parent=5 // pred_check_branch
        %1489 = sbr.rel (%p1487) target = $region64
      $region63: #{tpu_custom_call.1} parent=5 // pred_region
        %s1490 = ssub.s32 %s13, 2
      $region64: #{tpu_custom_call.1} parent=5 // pred_fallthru
        _
    $region6: #{tpu_custom_call.1} parent=1 // loop_footer
      %s17 = sadd.s32 1, %s13
    $region7: #{tpu_custom_call.1} parent=1 // loop_footer_branch
      %12 = sbr.rel target = $region3
    $region8: #{tpu_custom_call.1} parent=1 // loop_exit
      _
    %1491 = vsyncpa [#allocation6], 1
    %s1492 = scalar_lea.sflag [#allocation6], 1
    %1493 = vsyncpa %s1492, 1

</llo_original>
